<compile_context>
chip_gen: v6e
topology: v6e:2x2x1
jax: 0.10.0
libtpu: 0.0.40
codegen_flags: <defaults>
</compile_context>

<pallas_src>
import math

import jax
import jax.numpy as jnp
import numpy as np
from jax.experimental import pallas as pl
from jax.experimental.pallas import tpu as pltpu


def _erf_approx(x):
    # Abramowitz & Stegun 7.1.26, |err| ~1.5e-7; rational term uses the EUP
    # approximate reciprocal (free slot), well within the test tolerance.
    a1, a2, a3, a4, a5 = 0.254829592, -0.284496736, 1.421413741, -1.453152027, 1.061405429
    p = 0.3275911
    ax = jnp.abs(x)
    t = pl.reciprocal(1.0 + p * ax, approx=True)
    poly = ((((a5 * t + a4) * t + a3) * t + a2) * t + a1) * t
    y = 1.0 - poly * jnp.exp(-ax * ax)
    return jnp.where(x < 0, -y, y)


def _pick_tile(m, target=512):
    for t in (target, 256, 128, 64, 32, 16, 8):
        if t <= m and m % t == 0:
            return t
    return m


# ---------------- Kernel 1: the three token/channel-mixing matmuls (row-tiled) ----------------
def _mix_kernel(xh_ref, xw_ref, xc_ref, wh_ref, ww_ref, wc_ref, h_ref, w_ref, c_ref):
    h_ref[...] = jnp.dot(xh_ref[...], wh_ref[...],
                         preferred_element_type=jnp.float32).astype(h_ref.dtype)
    w_ref[...] = jnp.dot(xw_ref[...], ww_ref[...],
                         preferred_element_type=jnp.float32).astype(w_ref.dtype)
    c_ref[...] = jnp.dot(xc_ref[...].astype(jnp.bfloat16), wc_ref[...],
                         preferred_element_type=jnp.float32).astype(c_ref.dtype)


def _mix_matmuls(xh, xw, xc, wh, ww, wc):
    M, C = xc.shape
    TM = _pick_tile(M)
    row_spec = pl.BlockSpec((TM, C), lambda m: (m, 0))
    w_spec = pl.BlockSpec((C, C), lambda m: (0, 0))      # weights stay VMEM-resident
    out_sds = jax.ShapeDtypeStruct((M, C), jnp.bfloat16)
    cost = pl.CostEstimate(
        flops=int(2 * 3 * M * C * C),
        transcendentals=0,
        bytes_accessed=int(M * C * (2 + 2 + 4) + 3 * C * C * 2 + 3 * M * C * 2))
    return pl.pallas_call(
        _mix_kernel,
        grid=(M // TM,),
        in_specs=[row_spec, row_spec, row_spec, w_spec, w_spec, w_spec],
        out_specs=(row_spec, row_spec, row_spec),
        out_shape=(out_sds, out_sds, out_sds),
        compiler_params=pltpu.CompilerParams(
            dimension_semantics=("parallel",),
            vmem_limit_bytes=32 * 1024 * 1024),
        cost_estimate=cost,
    )(xh, xw, xc, wh, ww, wc)


# ------- Kernel 2: mean -> reweight MLP -> softmax -> combine -> proj (fused, per batch) -------
def _combine_kernel(h_ref, w_ref, c_ref, w1_ref, b1_ref, w2p_ref, b2p_ref,
                    wp_ref, bp_ref, o_ref):
    h = h_ref[...].astype(jnp.float32)          # (H*W, C)
    w = w_ref[...].astype(jnp.float32)
    c = c_ref[...].astype(jnp.float32)
    C = h.shape[-1]

    a = jnp.mean(h + w + c, axis=0, keepdims=True)                         # (1, C)

    z = jnp.dot(a, w1_ref[...], preferred_element_type=jnp.float32) + b1_ref[...]
    z = 0.5 * z * (1.0 + _erf_approx(z * (1.0 / math.sqrt(2.0))))          # exact GELU
    z = jnp.dot(z, w2p_ref[...], preferred_element_type=jnp.float32) + b2p_ref[...]  # (1, 3C)

    a0 = z[:, 0:C]
    a1 = z[:, C:2 * C]
    a2 = z[:, 2 * C:3 * C]
    m = jnp.maximum(jnp.maximum(a0, a1), a2)
    e0 = jnp.exp(a0 - m)
    e1 = jnp.exp(a1 - m)
    e2 = jnp.exp(a2 - m)
    inv = pl.reciprocal(e0 + e1 + e2, approx=True)

    y = h * (e0 * inv) + w * (e1 * inv) + c * (e2 * inv)                   # (H*W, C)
    o_ref[...] = (jnp.dot(y.astype(jnp.bfloat16), wp_ref[...],
                          preferred_element_type=jnp.float32) + bp_ref[...]).astype(o_ref.dtype)


def _combine(h, w, c, w1, b1, w2p, b2p, wp, bp):
    B, N, C = h.shape
    hid = w1.shape[1]
    bspec = pl.BlockSpec((pl.Squeezed(), N, C), lambda b: (b, 0, 0))

    def wspec(arr):
        return pl.BlockSpec(arr.shape, lambda b, _nd=arr.ndim: (0,) * _nd)

    cost = pl.CostEstimate(
        flops=int(2 * B * N * C * C + 2 * B * C * hid + 2 * B * hid * 3 * C + 12 * B * N * C),
        transcendentals=int(B * (hid + 4 * C)),
        bytes_accessed=int(3 * B * N * C * 2 + B * N * C * 4
                           + (C * hid + hid * 3 * C) * 4 + C * C * 2 + 4 * C * 4))
    return pl.pallas_call(
        _combine_kernel,
        grid=(B,),
        in_specs=[bspec, bspec, bspec,
                  wspec(w1), wspec(b1), wspec(w2p), wspec(b2p), wspec(wp), wspec(bp)],
        out_specs=pl.BlockSpec((pl.Squeezed(), N, C), lambda b: (b, 0, 0)),
        out_shape=jax.ShapeDtypeStruct((B, N, C), jnp.float32),
        compiler_params=pltpu.CompilerParams(
            dimension_semantics=("parallel",),
            vmem_limit_bytes=32 * 1024 * 1024),
        cost_estimate=cost,
    )(h, w, c, w1, b1, w2p, b2p, wp, bp)


# ------------------------------- Full forward pass -------------------------------
def weighted_permute_mlp(x, params, segment_dim):
    B, H, W, C = x.shape
    S = C // segment_dim
    assert H * S == C and W * S == C, "module requires H == W == segment_dim"
    N = H * W
    M = B * N
    bf = jnp.bfloat16

    # Layout glue (pure JAX relayout, bf16): build the permuted (M, C) views.
    x5 = x.reshape(B, H, W, segment_dim, S)
    xh = x5.transpose(0, 3, 2, 1, 4).reshape(M, C).astype(bf)   # rows (b, seg, w), cols (h, s)
    xw = x5.transpose(0, 1, 3, 2, 4).reshape(M, C).astype(bf)   # rows (b, h, seg), cols (w, s)
    xc = x.reshape(M, C)                                        # free reshape; cast in-kernel

    hp, wp_, cp = _mix_matmuls(xh, xw, xc,
                               params["wh"].astype(bf),
                               params["ww"].astype(bf),
                               params["wc"].astype(bf))

    # Undo the permutes (bf16 layout glue — half the HBM traffic of the fp32 version).
    h = hp.reshape(B, segment_dim, W, H, S).transpose(0, 3, 2, 1, 4).reshape(B, N, C)
    w = wp_.reshape(B, H, segment_dim, W, S).transpose(0, 1, 3, 2, 4).reshape(B, N, C)
    c = cp.reshape(B, N, C)

    out = _combine(h, w, c, params["w1"], params["b1"], params["w2p"], params["b2p"],
                   params["wp"].astype(bf), params["bp"])
    return out.reshape(B, H, W, C)


# ------------------------------ Params / reference ------------------------------
def init_params(key, dim):
    hid = dim // 4
    ks = jax.random.split(key, 9)

    def sc(fan_in):
        return 1.0 / math.sqrt(fan_in)

    wh = jax.random.normal(ks[0], (dim, dim), jnp.float32) * sc(dim)
    ww = jax.random.normal(ks[1], (dim, dim), jnp.float32) * sc(dim)
    wc = jax.random.normal(ks[2], (dim, dim), jnp.float32) * sc(dim)
    w1 = jax.random.normal(ks[3], (dim, hid), jnp.float32) * sc(dim)
    b1 = jax.random.normal(ks[4], (1, hid), jnp.float32) * 0.02
    w2 = jax.random.normal(ks[5], (hid, 3 * dim), jnp.float32) * sc(hid)
    b2 = jax.random.normal(ks[6], (1, 3 * dim), jnp.float32) * 0.02
    wp = jax.random.normal(ks[7], (dim, dim), jnp.float32) * sc(dim)
    bp = jax.random.normal(ks[8], (1, dim), jnp.float32) * 0.02

    # PyTorch interleaves fc2 output as [channel, branch]; regroup columns to
    # [branch, channel] so the kernel can slice each branch contiguously.
    perm = (3 * jnp.arange(dim)[None, :] + jnp.arange(3)[:, None]).reshape(-1)
    return dict(wh=wh, ww=ww, wc=wc, w1=w1, b1=b1, w2=w2, b2=b2,
                w2p=w2[:, perm], b2p=b2[:, perm], wp=wp, bp=bp)


def reference_forward(x, p, segment_dim):
    B, H, W, C = x.shape
    S = C // segment_dim
    hi = jax.lax.Precision.HIGHEST
    x5 = x.reshape(B, H, W, segment_dim, S)
    h = x5.transpose(0, 3, 2, 1, 4).reshape(B, segment_dim, W, H * S)
    h = jnp.dot(h, p["wh"], precision=hi).reshape(B, segment_dim, W, H, S)
    h = h.transpose(0, 3, 2, 1, 4).reshape(B, H, W, C)
    w = x5.transpose(0, 1, 3, 2, 4).reshape(B, H, segment_dim, W * S)
    w = jnp.dot(w, p["ww"], precision=hi).reshape(B, H, segment_dim, W, S)
    w = w.transpose(0, 1, 3, 2, 4).reshape(B, H, W, C)
    c = jnp.dot(x, p["wc"], precision=hi)
    a = (h + w + c).mean(axis=(1, 2))                       # (B, C)
    z = jnp.dot(a, p["w1"], precision=hi) + p["b1"]
    z = 0.5 * z * (1.0 + jax.scipy.special.erf(z / jnp.sqrt(2.0)))
    z = jnp.dot(z, p["w2"], precision=hi) + p["b2"]         # (B, 3C)
    aw = z.reshape(B, C, 3).transpose(2, 0, 1)              # (3, B, C)
    aw = jax.nn.softmax(aw, axis=0)
    y = (h * aw[0][:, None, None, :] + w * aw[1][:, None, None, :]
         + c * aw[2][:, None, None, :])
    return jnp.dot(y, p["wp"], precision=hi) + p["bp"]


if __name__ == "__main__":
    segment_dim = 8
    dim = 32                       # C; S = C // segment_dim = 4
    B, H, W = 2, segment_dim, segment_dim

    key = jax.random.PRNGKey(0)
    kx, kp = jax.random.split(key)
    x = jax.random.normal(kx, (B, H, W, dim), jnp.float32)
    params = init_params(kp, dim)

    fwd = jax.jit(weighted_permute_mlp, static_argnums=2)
    out = jax.block_until_ready(fwd(x, params, segment_dim))

    ref = reference_forward(x, params, segment_dim)
    assert out.shape == (B, H, W, dim)
    # Tolerance reflects bf16 matmul operands (fp32 accumulation) per perf guidance.
    np.testing.assert_allclose(np.asarray(out), np.asarray(ref), rtol=2e-2, atol=2e-2)
    print("KERNEL_OK")
</pallas_src>

<mosaic_0001>
module attributes {stable_mosaic.version = 11 : i64} {
  func.func @_mix_kernel(%arg0: i32, %arg1: memref<128x32xbf16, #tpu.memory_space<vmem>>, %arg2: memref<128x32xbf16, #tpu.memory_space<vmem>>, %arg3: memref<128x32xf32, #tpu.memory_space<vmem>>, %arg4: memref<32x32xbf16, #tpu.memory_space<vmem>>, %arg5: memref<32x32xbf16, #tpu.memory_space<vmem>>, %arg6: memref<32x32xbf16, #tpu.memory_space<vmem>>, %arg7: memref<128x32xbf16, #tpu.memory_space<vmem>>, %arg8: memref<128x32xbf16, #tpu.memory_space<vmem>>, %arg9: memref<128x32xbf16, #tpu.memory_space<vmem>>) attributes {dimension_semantics = [#tpu.dimension_semantics<parallel>], iteration_bounds = array<i64: 1>, scalar_prefetch = 0 : i64, scratch_operands = 0 : i64, tpu.core_type = #tpu.core_type<tc>, window_params = [{transform_indices = @transform_0, window_bounds = array<i64: 128, 32>}, {transform_indices = @transform_1, window_bounds = array<i64: 128, 32>}, {transform_indices = @transform_2, window_bounds = array<i64: 128, 32>}, {pipeline_mode = #tpu.pipeline_mode<synchronous>, transform_indices = @transform_3, window_bounds = array<i64: 32, 32>}, {pipeline_mode = #tpu.pipeline_mode<synchronous>, transform_indices = @transform_4, window_bounds = array<i64: 32, 32>}, {pipeline_mode = #tpu.pipeline_mode<synchronous>, transform_indices = @transform_5, window_bounds = array<i64: 32, 32>}, {transform_indices = @transform_6, window_bounds = array<i64: 128, 32>}, {transform_indices = @transform_7, window_bounds = array<i64: 128, 32>}, {transform_indices = @transform_8, window_bounds = array<i64: 128, 32>}]} {
    %c0 = arith.constant 0 : index
    %c0_0 = arith.constant 0 : index
    %0 = vector.load %arg1[%c0, %c0_0] : memref<128x32xbf16, #tpu.memory_space<vmem>>, vector<128x32xbf16>
    %c0_1 = arith.constant 0 : index
    %c0_2 = arith.constant 0 : index
    %1 = vector.load %arg4[%c0_1, %c0_2] : memref<32x32xbf16, #tpu.memory_space<vmem>>, vector<32x32xbf16>
    %cst = arith.constant dense<0.000000e+00> : vector<128x32xf32>
    %2 = tpu.matmul %0, %1, %cst {dimension_numbers = #tpu.dot_dimension_numbers<[1], [0], [0], [1], [0, 0, 1, 1], [], []>} : vector<128x32xbf16>, vector<32x32xbf16>, vector<128x32xf32> -> vector<128x32xf32>
    %3 = arith.truncf %2 : vector<128x32xf32> to vector<128x32xbf16>
    %c0_3 = arith.constant 0 : index
    %c0_4 = arith.constant 0 : index
    %4 = vector.load %arg7[%c0_3, %c0_4] : memref<128x32xbf16, #tpu.memory_space<vmem>>, vector<128x32xbf16>
    tpu.vector_store %arg7[%c0_3, %c0_4], %3 {strides = array<i32>} : memref<128x32xbf16, #tpu.memory_space<vmem>>, vector<128x32xbf16>,
    %c0_5 = arith.constant 0 : index
    %c0_6 = arith.constant 0 : index
    %5 = vector.load %arg2[%c0_5, %c0_6] : memref<128x32xbf16, #tpu.memory_space<vmem>>, vector<128x32xbf16>
    %c0_7 = arith.constant 0 : index
    %c0_8 = arith.constant 0 : index
    %6 = vector.load %arg5[%c0_7, %c0_8] : memref<32x32xbf16, #tpu.memory_space<vmem>>, vector<32x32xbf16>
    %cst_9 = arith.constant dense<0.000000e+00> : vector<128x32xf32>
    %7 = tpu.matmul %5, %6, %cst_9 {dimension_numbers = #tpu.dot_dimension_numbers<[1], [0], [0], [1], [0, 0, 1, 1], [], []>} : vector<128x32xbf16>, vector<32x32xbf16>, vector<128x32xf32> -> vector<128x32xf32>
    %8 = arith.truncf %7 : vector<128x32xf32> to vector<128x32xbf16>
    %c0_10 = arith.constant 0 : index
    %c0_11 = arith.constant 0 : index
    %9 = vector.load %arg8[%c0_10, %c0_11] : memref<128x32xbf16, #tpu.memory_space<vmem>>, vector<128x32xbf16>
    tpu.vector_store %arg8[%c0_10, %c0_11], %8 {strides = array<i32>} : memref<128x32xbf16, #tpu.memory_space<vmem>>, vector<128x32xbf16>,
    %c0_12 = arith.constant 0 : index
    %c0_13 = arith.constant 0 : index
    %10 = vector.load %arg3[%c0_12, %c0_13] : memref<128x32xf32, #tpu.memory_space<vmem>>, vector<128x32xf32>
    %11 = arith.truncf %10 : vector<128x32xf32> to vector<128x32xbf16>
    %c0_14 = arith.constant 0 : index
    %c0_15 = arith.constant 0 : index
    %12 = vector.load %arg6[%c0_14, %c0_15] : memref<32x32xbf16, #tpu.memory_space<vmem>>, vector<32x32xbf16>
    %cst_16 = arith.constant dense<0.000000e+00> : vector<128x32xf32>
    %13 = tpu.matmul %11, %12, %cst_16 {dimension_numbers = #tpu.dot_dimension_numbers<[1], [0], [0], [1], [0, 0, 1, 1], [], []>} : vector<128x32xbf16>, vector<32x32xbf16>, vector<128x32xf32> -> vector<128x32xf32>
    %14 = arith.truncf %13 : vector<128x32xf32> to vector<128x32xbf16>
    %c0_17 = arith.constant 0 : index
    %c0_18 = arith.constant 0 : index
    %15 = vector.load %arg9[%c0_17, %c0_18] : memref<128x32xbf16, #tpu.memory_space<vmem>>, vector<128x32xbf16>
    tpu.vector_store %arg9[%c0_17, %c0_18], %14 {strides = array<i32>} : memref<128x32xbf16, #tpu.memory_space<vmem>>, vector<128x32xbf16>,
    return
  }
  func.func @transform_0(%arg0: i32) -> (i32, i32) {
    %c0_i32 = arith.constant 0 : i32
    %c0_i32_0 = arith.constant 0 : i32
    return %arg0, %c0_i32 : i32, i32
  }
  func.func @transform_1(%arg0: i32) -> (i32, i32) {
    %c0_i32 = arith.constant 0 : i32
    %c0_i32_0 = arith.constant 0 : i32
    return %arg0, %c0_i32 : i32, i32
  }
  func.func @transform_2(%arg0: i32) -> (i32, i32) {
    %c0_i32 = arith.constant 0 : i32
    %c0_i32_0 = arith.constant 0 : i32
    return %arg0, %c0_i32 : i32, i32
  }
  func.func @transform_3(%arg0: i32) -> (i32, i32) {
    %c0_i32 = arith.constant 0 : i32
    %c0_i32_0 = arith.constant 0 : i32
    %c0_i32_1 = arith.constant 0 : i32
    return %c0_i32, %c0_i32_0 : i32, i32
  }
  func.func @transform_4(%arg0: i32) -> (i32, i32) {
    %c0_i32 = arith.constant 0 : i32
    %c0_i32_0 = arith.constant 0 : i32
    %c0_i32_1 = arith.constant 0 : i32
    return %c0_i32, %c0_i32_0 : i32, i32
  }
  func.func @transform_5(%arg0: i32) -> (i32, i32) {
    %c0_i32 = arith.constant 0 : i32
    %c0_i32_0 = arith.constant 0 : i32
    %c0_i32_1 = arith.constant 0 : i32
    return %c0_i32, %c0_i32_0 : i32, i32
  }
  func.func @transform_6(%arg0: i32) -> (i32, i32) {
    %c0_i32 = arith.constant 0 : i32
    %c0_i32_0 = arith.constant 0 : i32
    return %arg0, %c0_i32 : i32, i32
  }
  func.func @transform_7(%arg0: i32) -> (i32, i32) {
    %c0_i32 = arith.constant 0 : i32
    %c0_i32_0 = arith.constant 0 : i32
    return %arg0, %c0_i32 : i32, i32
  }
  func.func @transform_8(%arg0: i32) -> (i32, i32) {
    %c0_i32 = arith.constant 0 : i32
    %c0_i32_0 = arith.constant 0 : i32
    return %arg0, %c0_i32 : i32, i32
  }
}

module attributes {stable_mosaic.version = 11 : i64} {
  func.func @_combine_kernel(%arg0: i32, %arg1: memref<1x64x32xbf16, #tpu.memory_space<vmem>>, %arg2: memref<1x64x32xbf16, #tpu.memory_space<vmem>>, %arg3: memref<1x64x32xbf16, #tpu.memory_space<vmem>>, %arg4: memref<32x8xf32, #tpu.memory_space<vmem>>, %arg5: memref<1x8xf32, #tpu.memory_space<vmem>>, %arg6: memref<8x96xf32, #tpu.memory_space<vmem>>, %arg7: memref<1x96xf32, #tpu.memory_space<vmem>>, %arg8: memref<32x32xbf16, #tpu.memory_space<vmem>>, %arg9: memref<1x32xf32, #tpu.memory_space<vmem>>, %arg10: memref<1x64x32xf32, #tpu.memory_space<vmem>>) attributes {dimension_semantics = [#tpu.dimension_semantics<parallel>], iteration_bounds = array<i64: 2>, scalar_prefetch = 0 : i64, scratch_operands = 0 : i64, tpu.core_type = #tpu.core_type<tc>, window_params = [{transform_indices = @transform_0, window_bounds = array<i64: 1, 64, 32>}, {transform_indices = @transform_1, window_bounds = array<i64: 1, 64, 32>}, {transform_indices = @transform_2, window_bounds = array<i64: 1, 64, 32>}, {pipeline_mode = #tpu.pipeline_mode<synchronous>, transform_indices = @transform_3, window_bounds = array<i64: 32, 8>}, {pipeline_mode = #tpu.pipeline_mode<synchronous>, transform_indices = @transform_4, window_bounds = array<i64: 1, 8>}, {pipeline_mode = #tpu.pipeline_mode<synchronous>, transform_indices = @transform_5, window_bounds = array<i64: 8, 96>}, {pipeline_mode = #tpu.pipeline_mode<synchronous>, transform_indices = @transform_6, window_bounds = array<i64: 1, 96>}, {pipeline_mode = #tpu.pipeline_mode<synchronous>, transform_indices = @transform_7, window_bounds = array<i64: 32, 32>}, {pipeline_mode = #tpu.pipeline_mode<synchronous>, transform_indices = @transform_8, window_bounds = array<i64: 1, 32>}, {transform_indices = @transform_9, window_bounds = array<i64: 1, 64, 32>}]} {
    %c0 = arith.constant 0 : index
    %c0_0 = arith.constant 0 : index
    %c0_1 = arith.constant 0 : index
    %0 = vector.load %arg1[%c0, %c0_0, %c0_1] : memref<1x64x32xbf16, #tpu.memory_space<vmem>>, vector<1x64x32xbf16>
    %1 = vector.shape_cast %0 : vector<1x64x32xbf16> to vector<64x32xbf16>
    %2 = arith.extf %1 : vector<64x32xbf16> to vector<64x32xf32>
    %c0_2 = arith.constant 0 : index
    %c0_3 = arith.constant 0 : index
    %c0_4 = arith.constant 0 : index
    %3 = vector.load %arg2[%c0_2, %c0_3, %c0_4] : memref<1x64x32xbf16, #tpu.memory_space<vmem>>, vector<1x64x32xbf16>
    %4 = vector.shape_cast %3 : vector<1x64x32xbf16> to vector<64x32xbf16>
    %5 = arith.extf %4 : vector<64x32xbf16> to vector<64x32xf32>
    %c0_5 = arith.constant 0 : index
    %c0_6 = arith.constant 0 : index
    %c0_7 = arith.constant 0 : index
    %6 = vector.load %arg3[%c0_5, %c0_6, %c0_7] : memref<1x64x32xbf16, #tpu.memory_space<vmem>>, vector<1x64x32xbf16>
    %7 = vector.shape_cast %6 : vector<1x64x32xbf16> to vector<64x32xbf16>
    %8 = arith.extf %7 : vector<64x32xbf16> to vector<64x32xf32>
    %9 = arith.addf %2, %5 : vector<64x32xf32>
    %10 = arith.addf %9, %8 : vector<64x32xf32>
    %cst = arith.constant dense<0.000000e+00> : vector<32xf32>
    %11 = vector.multi_reduction <add>, %10, %cst [0] : vector<64x32xf32> to vector<32xf32>
    %12 = vector.shape_cast %11 : vector<32xf32> to vector<1x32xf32>
    %cst_8 = arith.constant 6.400000e+01 : f32
    %13 = vector.broadcast %cst_8 : f32 to vector<1x32xf32>
    %14 = arith.divf %12, %13 : vector<1x32xf32>
    %c0_9 = arith.constant 0 : index
    %c0_10 = arith.constant 0 : index
    %15 = vector.load %arg4[%c0_9, %c0_10] : memref<32x8xf32, #tpu.memory_space<vmem>>, vector<32x8xf32>
    %cst_11 = arith.constant dense<0.000000e+00> : vector<1x8xf32>
    %16 = tpu.matmul %14, %15, %cst_11 {dimension_numbers = #tpu.dot_dimension_numbers<[1], [0], [0], [1], [0, 0, 1, 1], [], []>} : vector<1x32xf32>, vector<32x8xf32>, vector<1x8xf32> -> vector<1x8xf32>
    %c0_12 = arith.constant 0 : index
    %c0_13 = arith.constant 0 : index
    %17 = vector.load %arg5[%c0_12, %c0_13] : memref<1x8xf32, #tpu.memory_space<vmem>>, vector<1x8xf32>
    %18 = arith.addf %16, %17 : vector<1x8xf32>
    %cst_14 = arith.constant 5.000000e-01 : f32
    %19 = vector.broadcast %cst_14 : f32 to vector<1x8xf32>
    %20 = arith.mulf %19, %18 : vector<1x8xf32>
    %cst_15 = arith.constant 0.707106769 : f32
    %21 = vector.broadcast %cst_15 : f32 to vector<1x8xf32>
    %22 = arith.mulf %18, %21 : vector<1x8xf32>
    %23 = math.absf %22 : vector<1x8xf32>
    %cst_16 = arith.constant 0.327591091 : f32
    %24 = vector.broadcast %cst_16 : f32 to vector<1x8xf32>
    %25 = arith.mulf %24, %23 : vector<1x8xf32>
    %cst_17 = arith.constant 1.000000e+00 : f32
    %26 = vector.broadcast %cst_17 : f32 to vector<1x8xf32>
    %27 = arith.addf %26, %25 : vector<1x8xf32>
    %28 = tpu.reciprocal %27 {approx = true} : vector<1x8xf32> -> vector<1x8xf32>
    %cst_18 = arith.constant 1.06140542 : f32
    %29 = vector.broadcast %cst_18 : f32 to vector<1x8xf32>
    %30 = arith.mulf %29, %28 : vector<1x8xf32>
    %cst_19 = arith.constant -1.45315206 : f32
    %31 = vector.broadcast %cst_19 : f32 to vector<1x8xf32>
    %32 = arith.addf %30, %31 : vector<1x8xf32>
    %33 = arith.mulf %32, %28 : vector<1x8xf32>
    %cst_20 = arith.constant 1.42141378 : f32
    %34 = vector.broadcast %cst_20 : f32 to vector<1x8xf32>
    %35 = arith.addf %33, %34 : vector<1x8xf32>
    %36 = arith.mulf %35, %28 : vector<1x8xf32>
    %cst_21 = arith.constant -0.284496725 : f32
    %37 = vector.broadcast %cst_21 : f32 to vector<1x8xf32>
    %38 = arith.addf %36, %37 : vector<1x8xf32>
    %39 = arith.mulf %38, %28 : vector<1x8xf32>
    %cst_22 = arith.constant 0.254829586 : f32
    %40 = vector.broadcast %cst_22 : f32 to vector<1x8xf32>
    %41 = arith.addf %39, %40 : vector<1x8xf32>
    %42 = arith.mulf %41, %28 : vector<1x8xf32>
    %cst_23 = arith.constant 0.000000e+00 : f32
    %43 = vector.broadcast %cst_23 : f32 to vector<1x8xf32>
    %44 = arith.subf %43, %23 : vector<1x8xf32>
    %45 = arith.mulf %44, %23 : vector<1x8xf32>
    %46 = math.exp %45 : vector<1x8xf32>
    %47 = arith.mulf %42, %46 : vector<1x8xf32>
    %cst_24 = arith.constant 1.000000e+00 : f32
    %48 = vector.broadcast %cst_24 : f32 to vector<1x8xf32>
    %49 = arith.subf %48, %47 : vector<1x8xf32>
    %cst_25 = arith.constant 0.000000e+00 : f32
    %50 = vector.broadcast %cst_25 : f32 to vector<1x8xf32>
    %51 = arith.cmpf olt, %22, %50 : vector<1x8xf32>
    %cst_26 = arith.constant 0.000000e+00 : f32
    %52 = vector.broadcast %cst_26 : f32 to vector<1x8xf32>
    %53 = arith.subf %52, %49 : vector<1x8xf32>
    %54 = arith.select %51, %53, %49 : vector<1x8xi1>, vector<1x8xf32>
    %cst_27 = arith.constant 1.000000e+00 : f32
    %55 = vector.broadcast %cst_27 : f32 to vector<1x8xf32>
    %56 = arith.addf %55, %54 : vector<1x8xf32>
    %57 = arith.mulf %20, %56 : vector<1x8xf32>
    %c0_28 = arith.constant 0 : index
    %c0_29 = arith.constant 0 : index
    %58 = vector.load %arg6[%c0_28, %c0_29] : memref<8x96xf32, #tpu.memory_space<vmem>>, vector<8x96xf32>
    %cst_30 = arith.constant dense<0.000000e+00> : vector<1x96xf32>
    %59 = tpu.matmul %57, %58, %cst_30 {dimension_numbers = #tpu.dot_dimension_numbers<[1], [0], [0], [1], [0, 0, 1, 1], [], []>} : vector<1x8xf32>, vector<8x96xf32>, vector<1x96xf32> -> vector<1x96xf32>
    %c0_31 = arith.constant 0 : index
    %c0_32 = arith.constant 0 : index
    %60 = vector.load %arg7[%c0_31, %c0_32] : memref<1x96xf32, #tpu.memory_space<vmem>>, vector<1x96xf32>
    %61 = arith.addf %59, %60 : vector<1x96xf32>
    %62 = vector.extract_strided_slice %61 {offsets = [0, 0], sizes = [1, 32], strides = [1, 1]} : vector<1x96xf32> to vector<1x32xf32>
    %63 = vector.extract_strided_slice %61 {offsets = [0, 32], sizes = [1, 32], strides = [1, 1]} : vector<1x96xf32> to vector<1x32xf32>
    %64 = vector.extract_strided_slice %61 {offsets = [0, 64], sizes = [1, 32], strides = [1, 1]} : vector<1x96xf32> to vector<1x32xf32>
    %65 = arith.maximumf %62, %63 : vector<1x32xf32>
    %66 = arith.maximumf %65, %64 : vector<1x32xf32>
    %67 = arith.subf %62, %66 : vector<1x32xf32>
    %68 = math.exp %67 : vector<1x32xf32>
    %69 = arith.subf %63, %66 : vector<1x32xf32>
    %70 = math.exp %69 : vector<1x32xf32>
    %71 = arith.subf %64, %66 : vector<1x32xf32>
    %72 = math.exp %71 : vector<1x32xf32>
    %73 = arith.addf %68, %70 : vector<1x32xf32>
    %74 = arith.addf %73, %72 : vector<1x32xf32>
    %75 = tpu.reciprocal %74 {approx = true} : vector<1x32xf32> -> vector<1x32xf32>
    %76 = arith.mulf %68, %75 : vector<1x32xf32>
    %77 = vector.broadcast %76 : vector<1x32xf32> to vector<64x32xf32>
    %78 = arith.mulf %2, %77 : vector<64x32xf32>
    %79 = arith.mulf %70, %75 : vector<1x32xf32>
    %80 = vector.broadcast %79 : vector<1x32xf32> to vector<64x32xf32>
    %81 = arith.mulf %5, %80 : vector<64x32xf32>
    %82 = arith.addf %78, %81 : vector<64x32xf32>
    %83 = arith.mulf %72, %75 : vector<1x32xf32>
    %84 = vector.broadcast %83 : vector<1x32xf32> to vector<64x32xf32>
    %85 = arith.mulf %8, %84 : vector<64x32xf32>
    %86 = arith.addf %82, %85 : vector<64x32xf32>
    %87 = arith.truncf %86 : vector<64x32xf32> to vector<64x32xbf16>
    %c0_33 = arith.constant 0 : index
    %c0_34 = arith.constant 0 : index
    %88 = vector.load %arg8[%c0_33, %c0_34] : memref<32x32xbf16, #tpu.memory_space<vmem>>, vector<32x32xbf16>
    %cst_35 = arith.constant dense<0.000000e+00> : vector<64x32xf32>
    %89 = tpu.matmul %87, %88, %cst_35 {dimension_numbers = #tpu.dot_dimension_numbers<[1], [0], [0], [1], [0, 0, 1, 1], [], []>} : vector<64x32xbf16>, vector<32x32xbf16>, vector<64x32xf32> -> vector<64x32xf32>
    %c0_36 = arith.constant 0 : index
    %c0_37 = arith.constant 0 : index
    %90 = vector.load %arg9[%c0_36, %c0_37] : memref<1x32xf32, #tpu.memory_space<vmem>>, vector<1x32xf32>
    %91 = vector.broadcast %90 : vector<1x32xf32> to vector<64x32xf32>
    %92 = arith.addf %89, %91 : vector<64x32xf32>
    %c0_38 = arith.constant 0 : index
    %c0_39 = arith.constant 0 : index
    %c0_40 = arith.constant 0 : index
    %93 = vector.load %arg10[%c0_38, %c0_39, %c0_40] : memref<1x64x32xf32, #tpu.memory_space<vmem>>, vector<1x64x32xf32>
    %94 = vector.shape_cast %93 : vector<1x64x32xf32> to vector<64x32xf32>
    %95 = vector.shape_cast %92 : vector<64x32xf32> to vector<1x64x32xf32>
    tpu.vector_store %arg10[%c0_38, %c0_39, %c0_40], %95 {strides = array<i32>} : memref<1x64x32xf32, #tpu.memory_space<vmem>>, vector<1x64x32xf32>,
    return
  }
  func.func @transform_0(%arg0: i32) -> (i32, i32, i32) {
    %c0_i32 = arith.constant 0 : i32
    %c0_i32_0 = arith.constant 0 : i32
    %c0_i32_1 = arith.constant 0 : i32
    return %arg0, %c0_i32, %c0_i32_0 : i32, i32, i32
  }
  func.func @transform_1(%arg0: i32) -> (i32, i32, i32) {
    %c0_i32 = arith.constant 0 : i32
    %c0_i32_0 = arith.constant 0 : i32
    %c0_i32_1 = arith.constant 0 : i32
    return %arg0, %c0_i32, %c0_i32_0 : i32, i32, i32
  }
  func.func @transform_2(%arg0: i32) -> (i32, i32, i32) {
    %c0_i32 = arith.constant 0 : i32
    %c0_i32_0 = arith.constant 0 : i32
    %c0_i32_1 = arith.constant 0 : i32
    return %arg0, %c0_i32, %c0_i32_0 : i32, i32, i32
  }
  func.func @transform_3(%arg0: i32) -> (i32, i32) {
    %c0_i32 = arith.constant 0 : i32
    %c0_i32_0 = arith.constant 0 : i32
    %c0_i32_1 = arith.constant 0 : i32
    return %c0_i32, %c0_i32_0 : i32, i32
  }
  func.func @transform_4(%arg0: i32) -> (i32, i32) {
    %c0_i32 = arith.constant 0 : i32
    %c0_i32_0 = arith.constant 0 : i32
    %c0_i32_1 = arith.constant 0 : i32
    return %c0_i32, %c0_i32_0 : i32, i32
  }
  func.func @transform_5(%arg0: i32) -> (i32, i32) {
    %c0_i32 = arith.constant 0 : i32
    %c0_i32_0 = arith.constant 0 : i32
    %c0_i32_1 = arith.constant 0 : i32
    return %c0_i32, %c0_i32_0 : i32, i32
  }
  func.func @transform_6(%arg0: i32) -> (i32, i32) {
    %c0_i32 = arith.constant 0 : i32
    %c0_i32_0 = arith.constant 0 : i32
    %c0_i32_1 = arith.constant 0 : i32
    return %c0_i32, %c0_i32_0 : i32, i32
  }
  func.func @transform_7(%arg0: i32) -> (i32, i32) {
    %c0_i32 = arith.constant 0 : i32
    %c0_i32_0 = arith.constant 0 : i32
    %c0_i32_1 = arith.constant 0 : i32
    return %c0_i32, %c0_i32_0 : i32, i32
  }
  func.func @transform_8(%arg0: i32) -> (i32, i32) {
    %c0_i32 = arith.constant 0 : i32
    %c0_i32_0 = arith.constant 0 : i32
    %c0_i32_1 = arith.constant 0 : i32
    return %c0_i32, %c0_i32_0 : i32, i32
  }
  func.func @transform_9(%arg0: i32) -> (i32, i32, i32) {
    %c0_i32 = arith.constant 0 : i32
    %c0_i32_0 = arith.constant 0 : i32
    %c0_i32_1 = arith.constant 0 : i32
    return %arg0, %c0_i32, %c0_i32_0 : i32, i32, i32
  }
}

</mosaic_0001>

<llo_original>
// kernel: weighted_permute_mlp.2
$region0: #{weighted_permute_mlp.2}
  #allocation0 [shape = 'u32[]', space=smem, size = 0x4, offset = 0x4, fixed_abs, tag = 'smem constant byte address 0x4 - core index']
  #allocation1 [shape = 'u32[144,128]{1,0:T(1,128)}', space=vmem, size = 0x12000, scoped, tag = 'internal scratch']
  %s0 = inlined_call_operand.vmem [shape: bf16[128,32], index: 0, kind: input, shape index: {}]
  %s1 = inlined_call_operand.vmem [shape: bf16[128,32], index: 1, kind: input, shape index: {}]
  %s2 = inlined_call_operand.vmem [shape: f32[128,32], index: 2, kind: input, shape index: {}]
  %s3 = inlined_call_operand.vmem [shape: bf16[32,32], index: 3, kind: input, shape index: {}]
  %s4 = inlined_call_operand.vmem [shape: bf16[32,32], index: 4, kind: input, shape index: {}]
  %s5 = inlined_call_operand.vmem [shape: bf16[32,32], index: 5, kind: input, shape index: {}]
  %s6 = inlined_call_operand.vmem [shape: bf16[128,32], index: 6, kind: output, shape index: {0}]
  %s7 = inlined_call_operand.vmem [shape: bf16[128,32], index: 7, kind: output, shape index: {1}]
  %s8 = inlined_call_operand.vmem [shape: bf16[128,32], index: 8, kind: output, shape index: {2}]
  %9 = xla_tuple %s6, %s7, %s8
  %s10 = sld [smem:[#allocation0]]
  $region50: #{weighted_permute_mlp.2} parent=0
    _
  %s12 = ssub.s32 1, %s10
  %s13 = scalar_select 0, %s12, %s10
  // Predicated region
  $region2: #{weighted_permute_mlp.2} parent=0 // pred_check
    _
  $region3: #{weighted_permute_mlp.2} parent=0 // pred_check_branch
    %15 = sbr.rel (0) target = $region5
  $region4: #{weighted_permute_mlp.2} parent=0 // pred_region
    _
  $region5: #{weighted_permute_mlp.2} parent=0 // pred_fallthru
    _
  // Predicated region
  $region6: #{weighted_permute_mlp.2} parent=0 // pred_check
    _
  $region7: #{weighted_permute_mlp.2} parent=0 // pred_check_branch
    %17 = sbr.rel (0) target = $region9
  $region8: #{weighted_permute_mlp.2} parent=0 // pred_region
    _
  $region9: #{weighted_permute_mlp.2} parent=0 // pred_fallthru
    _
  // Predicated region
  $region10: #{weighted_permute_mlp.2} parent=0 // pred_check
    _
  $region11: #{weighted_permute_mlp.2} parent=0 // pred_check_branch
    %19 = sbr.rel (0) target = $region13
  $region12: #{weighted_permute_mlp.2} parent=0 // pred_region
    _
  $region13: #{weighted_permute_mlp.2} parent=0 // pred_fallthru
    _
  // Predicated region
  $region14: #{weighted_permute_mlp.2} parent=0 // pred_check
    _
  $region15: #{weighted_permute_mlp.2} parent=0 // pred_check_branch
    %21 = sbr.rel (0) target = $region17
  $region16: #{weighted_permute_mlp.2} parent=0 // pred_region
    _
  $region17: #{weighted_permute_mlp.2} parent=0 // pred_fallthru
    _
  // Predicated region
  $region18: #{weighted_permute_mlp.2} parent=0 // pred_check
    _
  $region19: #{weighted_permute_mlp.2} parent=0 // pred_check_branch
    %23 = sbr.rel (0) target = $region21
  $region20: #{weighted_permute_mlp.2} parent=0 // pred_region
    _
  $region21: #{weighted_permute_mlp.2} parent=0 // pred_fallthru
    _
  // Predicated region
  $region22: #{weighted_permute_mlp.2} parent=0 // pred_check
    _
  $region23: #{weighted_permute_mlp.2} parent=0 // pred_check_branch
    %25 = sbr.rel (0) target = $region25
  $region24: #{weighted_permute_mlp.2} parent=0 // pred_region
    _
  $region25: #{weighted_permute_mlp.2} parent=0 // pred_fallthru
    _
  %v27 = vld [vmem:[%s0] sm:$0xf]
  %v28 = vld [vmem:[%s0 + $0x4] sm:$0xf]
  %v29 = vld [vmem:[%s0 + $0x8] sm:$0xf]
  %v30 = vld [vmem:[%s0 + $0xc] sm:$0xf]
  %v31 = vld [vmem:[%s0 + $0x10] sm:$0xf]
  %v32 = vld [vmem:[%s0 + $0x14] sm:$0xf]
  %v33 = vld [vmem:[%s0 + $0x18] sm:$0xf]
  %v34 = vld [vmem:[%s0 + $0x1c] sm:$0xf]
  %v35 = vld [vmem:[%s0 + $0x20] sm:$0xf]
  %v36 = vld [vmem:[%s0 + $0x24] sm:$0xf]
  %v37 = vld [vmem:[%s0 + $0x28] sm:$0xf]
  %v38 = vld [vmem:[%s0 + $0x2c] sm:$0xf]
  %v39 = vld [vmem:[%s0 + $0x30] sm:$0xf]
  %v40 = vld [vmem:[%s0 + $0x34] sm:$0xf]
  %v41 = vld [vmem:[%s0 + $0x38] sm:$0xf]
  %v42 = vld [vmem:[%s0 + $0x3c] sm:$0xf]
  %v43 = vld [vmem:[%s3] sm:$0xf]
  %v44 = vld [vmem:[%s3 + $0x4] sm:$0xf]
  %v45 = vld [vmem:[%s3 + $0x8] sm:$0xf]
  %v46 = vld [vmem:[%s3 + $0xc] sm:$0xf]
  %v63 = vunpack.c.l.b16 %v27
  %v64 = vunpack.c.l.b16 %v28
  %v65 = vunpack.c.l.b16 %v29
  %v66 = vunpack.c.l.b16 %v30
  %v67 = vunpack.c.l.b16 %v31
  %v68 = vunpack.c.l.b16 %v32
  %v69 = vunpack.c.l.b16 %v33
  %v70 = vunpack.c.l.b16 %v34
  %v71 = vunpack.c.l.b16 %v35
  %v72 = vunpack.c.l.b16 %v36
  %v73 = vunpack.c.l.b16 %v37
  %v74 = vunpack.c.l.b16 %v38
  %v75 = vunpack.c.l.b16 %v39
  %v76 = vunpack.c.l.b16 %v40
  %v77 = vunpack.c.l.b16 %v41
  %v78 = vunpack.c.l.b16 %v42
  %v79 = vpack.c.b16 %v64, %v63
  %v80 = vpack.c.b16 %v66, %v65
  %v81 = vpack.c.b16 %v68, %v67
  %v82 = vpack.c.b16 %v70, %v69
  %v83 = vpack.c.b16 %v72, %v71
  %v84 = vpack.c.b16 %v74, %v73
  %v85 = vpack.c.b16 %v76, %v75
  %v86 = vpack.c.b16 %v78, %v77
  %v91 = vunpack.c.l.b16 %v43
  %v92 = vunpack.c.l.b16 %v44
  %v93 = vunpack.c.l.b16 %v45
  %v94 = vunpack.c.l.b16 %v46
  %v95 = vpack.c.b16 %v92, %v91
  %v96 = vpack.c.b16 %v94, %v93
  %vm99 = vcmask 261120
  %v101 = vsel %vm99, %v79, 0
  %v104 = vsel %vm99, %v80, 0
  %v107 = vsel %vm99, %v81, 0
  %v110 = vsel %vm99, %v82, 0
  %v113 = vsel %vm99, %v83, 0
  %v116 = vsel %vm99, %v84, 0
  %v119 = vsel %vm99, %v85, 0
  %v122 = vsel %vm99, %v86, 0
  %124 = vmatprep.subr.bf16.mxu0 0
  %125 = vmatpush1.bf16.msra.mxu0 0
  %126 = vmatprep.subr.bf16.mxu0 0
  %127 = vmatpush1.bf16.msra.mxu0 0
  %128 = vmatprep.subr.bf16.mxu0 0
  %129 = vmatpush1.bf16.msra.mxu0 0
  %130 = vmatprep.subr.bf16.mxu0 0
  %131 = vmatpush1.bf16.msra.mxu0 0
  %132 = vmatprep.subr.bf16.mxu0 0
  %133 = vmatpush1.bf16.msra.mxu0 0
  %134 = vmatprep.subr.bf16.mxu0 0
  %135 = vmatpush1.bf16.msra.mxu0 0
  %136 = vmatprep.subr.bf16.mxu0 0
  %137 = vmatpush1.bf16.msra.mxu0 %v96
  %138 = vmatprep.subr.bf16.mxu0 0
  %139 = vmatpush1.bf16.msra.mxu0 %v95
  %140 = vmatprep.subr.bf16.mxu0 0
  %141 = vmatpush2.bf16.msra.mxu0 0
  %142 = vmatprep.subr.bf16.mxu0 0
  %143 = vmatpush2.bf16.msra.mxu0 0
  %144 = vmatprep.subr.bf16.mxu0 0
  %145 = vmatpush2.bf16.msra.mxu0 0
  %146 = vmatprep.subr.bf16.mxu0 0
  %147 = vmatpush2.bf16.msra.mxu0 0
  %148 = vmatprep.subr.bf16.mxu0 0
  %149 = vmatpush2.bf16.msra.mxu0 0
  %150 = vmatprep.subr.bf16.mxu0 0
  %151 = vmatpush2.bf16.msra.mxu0 0
  %152 = vmatprep.subr.bf16.mxu0 0
  %153 = vmatpush2.bf16.msra.mxu0 0
  %154 = vmatprep.subr.bf16.mxu0 0
  %155 = vmatpush2.bf16.msra.mxu0 0
  %156 = vmatprep.mubr.bf16.mxu0 0
  %157 = vmatmul.mubr.bf16.gmra.mxu0 %v101
  %v158 = vpop.f32.mrf.mxu0
  %v159 = vadd.f32 0.0, %v158
  %v160 = vpop.f32.mrf.mxu0
  %v161 = vpop.f32.mrf.mxu0
  %v162 = vadd.f32 0.0, %v161
  %v163 = vpop.f32.mrf.mxu0
  %164 = vmatprep.mubr.bf16.mxu0 0
  %165 = vmatmul.mubr.bf16.gmra.mxu0 %v104
  %v166 = vpop.f32.mrf.mxu0
  %v167 = vadd.f32 0.0, %v166
  %v168 = vpop.f32.mrf.mxu0
  %v169 = vpop.f32.mrf.mxu0
  %v170 = vadd.f32 0.0, %v169
  %v171 = vpop.f32.mrf.mxu0
  %172 = vmatprep.mubr.bf16.mxu0 0
  %173 = vmatmul.mubr.bf16.gmra.mxu0 %v107
  %v174 = vpop.f32.mrf.mxu0
  %v175 = vadd.f32 0.0, %v174
  %v176 = vpop.f32.mrf.mxu0
  %v177 = vpop.f32.mrf.mxu0
  %v178 = vadd.f32 0.0, %v177
  %v179 = vpop.f32.mrf.mxu0
  %180 = vmatprep.mubr.bf16.mxu0 0
  %181 = vmatmul.mubr.bf16.gmra.mxu0 %v110
  %v182 = vpop.f32.mrf.mxu0
  %v183 = vadd.f32 0.0, %v182
  %v184 = vpop.f32.mrf.mxu0
  %v185 = vpop.f32.mrf.mxu0
  %v186 = vadd.f32 0.0, %v185
  %v187 = vpop.f32.mrf.mxu0
  %188 = vmatprep.mubr.bf16.mxu0 0
  %189 = vmatmul.mubr.bf16.gmra.mxu0 %v113
  %v190 = vpop.f32.mrf.mxu0
  %v191 = vadd.f32 0.0, %v190
  %v192 = vpop.f32.mrf.mxu0
  %v193 = vpop.f32.mrf.mxu0
  %v194 = vadd.f32 0.0, %v193
  %v195 = vpop.f32.mrf.mxu0
  %196 = vmatprep.mubr.bf16.mxu0 0
  %197 = vmatmul.mubr.bf16.gmra.mxu0 %v116
  %v198 = vpop.f32.mrf.mxu0
  %v199 = vadd.f32 0.0, %v198
  %v200 = vpop.f32.mrf.mxu0
  %v201 = vpop.f32.mrf.mxu0
  %v202 = vadd.f32 0.0, %v201
  %v203 = vpop.f32.mrf.mxu0
  %204 = vmatprep.mubr.bf16.mxu0 0
  %205 = vmatmul.mubr.bf16.gmra.mxu0 %v119
  %v206 = vpop.f32.mrf.mxu0
  %v207 = vadd.f32 0.0, %v206
  %v208 = vpop.f32.mrf.mxu0
  %v209 = vpop.f32.mrf.mxu0
  %v210 = vadd.f32 0.0, %v209
  %v211 = vpop.f32.mrf.mxu0
  %212 = vmatprep.mubr.bf16.mxu0 0
  %213 = vmatmul.mubr.bf16.gmra.mxu0 %v122
  %v214 = vpop.f32.mrf.mxu0
  %v215 = vadd.f32 0.0, %v214
  %v216 = vpop.f32.mrf.mxu0
  %v217 = vpop.f32.mrf.mxu0
  %v218 = vadd.f32 0.0, %v217
  %v219 = vpop.f32.mrf.mxu0
  %220 = vdwg.mxu0
  %v221 = vpack.c.bf16 %v162, %v159
  %v222 = vpack.c.bf16 %v170, %v167
  %v223 = vpack.c.bf16 %v178, %v175
  %v224 = vpack.c.bf16 %v186, %v183
  %v225 = vpack.c.bf16 %v194, %v191
  %v226 = vpack.c.bf16 %v202, %v199
  %v227 = vpack.c.bf16 %v210, %v207
  %v228 = vpack.c.bf16 %v218, %v215
  %v237 = vunpack.c.l.b16 %v221
  %v238 = vunpack.c.h.b16 %v221
  %v239 = vunpack.c.l.b16 %v222
  %v240 = vunpack.c.h.b16 %v222
  %v241 = vunpack.c.l.b16 %v223
  %v242 = vunpack.c.h.b16 %v223
  %v243 = vunpack.c.l.b16 %v224
  %v244 = vunpack.c.h.b16 %v224
  %v245 = vunpack.c.l.b16 %v225
  %v246 = vunpack.c.h.b16 %v225
  %v247 = vunpack.c.l.b16 %v226
  %v248 = vunpack.c.h.b16 %v226
  %v249 = vunpack.c.l.b16 %v227
  %v250 = vunpack.c.h.b16 %v227
  %v251 = vunpack.c.l.b16 %v228
  %v252 = vunpack.c.h.b16 %v228
  %v253 = vpack.c.b16 %v237, %v237
  %v254 = vpack.c.b16 %v238, %v238
  %v255 = vpack.c.b16 %v239, %v239
  %v256 = vpack.c.b16 %v240, %v240
  %v257 = vpack.c.b16 %v241, %v241
  %v258 = vpack.c.b16 %v242, %v242
  %v259 = vpack.c.b16 %v243, %v243
  %v260 = vpack.c.b16 %v244, %v244
  %v261 = vpack.c.b16 %v245, %v245
  %v262 = vpack.c.b16 %v246, %v246
  %v263 = vpack.c.b16 %v247, %v247
  %v264 = vpack.c.b16 %v248, %v248
  %v265 = vpack.c.b16 %v249, %v249
  %v266 = vpack.c.b16 %v250, %v250
  %v267 = vpack.c.b16 %v251, %v251
  %v268 = vpack.c.b16 %v252, %v252
  %vm285 = vcmask 257024
  %286 = vst.msk [vmem:[%s6] sm:$0xf] %vm285, %v253
  %287 = vst.msk [vmem:[%s6 + $0x4] sm:$0xf] %vm285, %v254
  %288 = vst.msk [vmem:[%s6 + $0x8] sm:$0xf] %vm285, %v255
  %289 = vst.msk [vmem:[%s6 + $0xc] sm:$0xf] %vm285, %v256
  %290 = vst.msk [vmem:[%s6 + $0x10] sm:$0xf] %vm285, %v257
  %291 = vst.msk [vmem:[%s6 + $0x14] sm:$0xf] %vm285, %v258
  %292 = vst.msk [vmem:[%s6 + $0x18] sm:$0xf] %vm285, %v259
  %293 = vst.msk [vmem:[%s6 + $0x1c] sm:$0xf] %vm285, %v260
  %294 = vst.msk [vmem:[%s6 + $0x20] sm:$0xf] %vm285, %v261
  %295 = vst.msk [vmem:[%s6 + $0x24] sm:$0xf] %vm285, %v262
  %296 = vst.msk [vmem:[%s6 + $0x28] sm:$0xf] %vm285, %v263
  %297 = vst.msk [vmem:[%s6 + $0x2c] sm:$0xf] %vm285, %v264
  %298 = vst.msk [vmem:[%s6 + $0x30] sm:$0xf] %vm285, %v265
  %299 = vst.msk [vmem:[%s6 + $0x34] sm:$0xf] %vm285, %v266
  %300 = vst.msk [vmem:[%s6 + $0x38] sm:$0xf] %vm285, %v267
  %301 = vst.msk [vmem:[%s6 + $0x3c] sm:$0xf] %vm285, %v268
  %v302 = vld [vmem:[%s1] sm:$0xf]
  %v303 = vld [vmem:[%s1 + $0x4] sm:$0xf]
  %v304 = vld [vmem:[%s1 + $0x8] sm:$0xf]
  %v305 = vld [vmem:[%s1 + $0xc] sm:$0xf]
  %v306 = vld [vmem:[%s1 + $0x10] sm:$0xf]
  %v307 = vld [vmem:[%s1 + $0x14] sm:$0xf]
  %v308 = vld [vmem:[%s1 + $0x18] sm:$0xf]
  %v309 = vld [vmem:[%s1 + $0x1c] sm:$0xf]
  %v310 = vld [vmem:[%s1 + $0x20] sm:$0xf]
  %v311 = vld [vmem:[%s1 + $0x24] sm:$0xf]
  %v312 = vld [vmem:[%s1 + $0x28] sm:$0xf]
  %v313 = vld [vmem:[%s1 + $0x2c] sm:$0xf]
  %v314 = vld [vmem:[%s1 + $0x30] sm:$0xf]
  %v315 = vld [vmem:[%s1 + $0x34] sm:$0xf]
  %v316 = vld [vmem:[%s1 + $0x38] sm:$0xf]
  %v317 = vld [vmem:[%s1 + $0x3c] sm:$0xf]
  %v318 = vld [vmem:[%s4] sm:$0xf]
  %v319 = vld [vmem:[%s4 + $0x4] sm:$0xf]
  %v320 = vld [vmem:[%s4 + $0x8] sm:$0xf]
  %v321 = vld [vmem:[%s4 + $0xc] sm:$0xf]
  %v338 = vunpack.c.l.b16 %v302
  %v339 = vunpack.c.l.b16 %v303
  %v340 = vunpack.c.l.b16 %v304
  %v341 = vunpack.c.l.b16 %v305
  %v342 = vunpack.c.l.b16 %v306
  %v343 = vunpack.c.l.b16 %v307
  %v344 = vunpack.c.l.b16 %v308
  %v345 = vunpack.c.l.b16 %v309
  %v346 = vunpack.c.l.b16 %v310
  %v347 = vunpack.c.l.b16 %v311
  %v348 = vunpack.c.l.b16 %v312
  %v349 = vunpack.c.l.b16 %v313
  %v350 = vunpack.c.l.b16 %v314
  %v351 = vunpack.c.l.b16 %v315
  %v352 = vunpack.c.l.b16 %v316
  %v353 = vunpack.c.l.b16 %v317
  %v354 = vpack.c.b16 %v339, %v338
  %v355 = vpack.c.b16 %v341, %v340
  %v356 = vpack.c.b16 %v343, %v342
  %v357 = vpack.c.b16 %v345, %v344
  %v358 = vpack.c.b16 %v347, %v346
  %v359 = vpack.c.b16 %v349, %v348
  %v360 = vpack.c.b16 %v351, %v350
  %v361 = vpack.c.b16 %v353, %v352
  %v366 = vunpack.c.l.b16 %v318
  %v367 = vunpack.c.l.b16 %v319
  %v368 = vunpack.c.l.b16 %v320
  %v369 = vunpack.c.l.b16 %v321
  %v370 = vpack.c.b16 %v367, %v366
  %v371 = vpack.c.b16 %v369, %v368
  %v375 = vsel %vm99, %v354, 0
  %v378 = vsel %vm99, %v355, 0
  %v381 = vsel %vm99, %v356, 0
  %v384 = vsel %vm99, %v357, 0
  %v387 = vsel %vm99, %v358, 0
  %v390 = vsel %vm99, %v359, 0
  %v393 = vsel %vm99, %v360, 0
  %v396 = vsel %vm99, %v361, 0
  %398 = vmatprep.subr.bf16.mxu0 0
  %399 = vmatpush1.bf16.msra.mxu0 0
  %400 = vmatprep.subr.bf16.mxu0 0
  %401 = vmatpush1.bf16.msra.mxu0 0
  %402 = vmatprep.subr.bf16.mxu0 0
  %403 = vmatpush1.bf16.msra.mxu0 0
  %404 = vmatprep.subr.bf16.mxu0 0
  %405 = vmatpush1.bf16.msra.mxu0 0
  %406 = vmatprep.subr.bf16.mxu0 0
  %407 = vmatpush1.bf16.msra.mxu0 0
  %408 = vmatprep.subr.bf16.mxu0 0
  %409 = vmatpush1.bf16.msra.mxu0 0
  %410 = vmatprep.subr.bf16.mxu0 0
  %411 = vmatpush1.bf16.msra.mxu0 %v371
  %412 = vmatprep.subr.bf16.mxu0 0
  %413 = vmatpush1.bf16.msra.mxu0 %v370
  %414 = vmatprep.subr.bf16.mxu0 0
  %415 = vmatpush2.bf16.msra.mxu0 0
  %416 = vmatprep.subr.bf16.mxu0 0
  %417 = vmatpush2.bf16.msra.mxu0 0
  %418 = vmatprep.subr.bf16.mxu0 0
  %419 = vmatpush2.bf16.msra.mxu0 0
  %420 = vmatprep.subr.bf16.mxu0 0
  %421 = vmatpush2.bf16.msra.mxu0 0
  %422 = vmatprep.subr.bf16.mxu0 0
  %423 = vmatpush2.bf16.msra.mxu0 0
  %424 = vmatprep.subr.bf16.mxu0 0
  %425 = vmatpush2.bf16.msra.mxu0 0
  %426 = vmatprep.subr.bf16.mxu0 0
  %427 = vmatpush2.bf16.msra.mxu0 0
  %428 = vmatprep.subr.bf16.mxu0 0
  %429 = vmatpush2.bf16.msra.mxu0 0
  %430 = vmatprep.mubr.bf16.mxu0 0
  %431 = vmatmul.mubr.bf16.gmra.mxu0 %v375
  %v432 = vpop.f32.mrf.mxu0
  %v433 = vadd.f32 0.0, %v432
  %v434 = vpop.f32.mrf.mxu0
  %v435 = vpop.f32.mrf.mxu0
  %v436 = vadd.f32 0.0, %v435
  %v437 = vpop.f32.mrf.mxu0
  %438 = vmatprep.mubr.bf16.mxu0 0
  %439 = vmatmul.mubr.bf16.gmra.mxu0 %v378
  %v440 = vpop.f32.mrf.mxu0
  %v441 = vadd.f32 0.0, %v440
  %v442 = vpop.f32.mrf.mxu0
  %v443 = vpop.f32.mrf.mxu0
  %v444 = vadd.f32 0.0, %v443
  %v445 = vpop.f32.mrf.mxu0
  %446 = vmatprep.mubr.bf16.mxu0 0
  %447 = vmatmul.mubr.bf16.gmra.mxu0 %v381
  %v448 = vpop.f32.mrf.mxu0
  %v449 = vadd.f32 0.0, %v448
  %v450 = vpop.f32.mrf.mxu0
  %v451 = vpop.f32.mrf.mxu0
  %v452 = vadd.f32 0.0, %v451
  %v453 = vpop.f32.mrf.mxu0
  %454 = vmatprep.mubr.bf16.mxu0 0
  %455 = vmatmul.mubr.bf16.gmra.mxu0 %v384
  %v456 = vpop.f32.mrf.mxu0
  %v457 = vadd.f32 0.0, %v456
  %v458 = vpop.f32.mrf.mxu0
  %v459 = vpop.f32.mrf.mxu0
  %v460 = vadd.f32 0.0, %v459
  %v461 = vpop.f32.mrf.mxu0
  %462 = vmatprep.mubr.bf16.mxu0 0
  %463 = vmatmul.mubr.bf16.gmra.mxu0 %v387
  %v464 = vpop.f32.mrf.mxu0
  %v465 = vadd.f32 0.0, %v464
  %v466 = vpop.f32.mrf.mxu0
  %v467 = vpop.f32.mrf.mxu0
  %v468 = vadd.f32 0.0, %v467
  %v469 = vpop.f32.mrf.mxu0
  %470 = vmatprep.mubr.bf16.mxu0 0
  %471 = vmatmul.mubr.bf16.gmra.mxu0 %v390
  %v472 = vpop.f32.mrf.mxu0
  %v473 = vadd.f32 0.0, %v472
  %v474 = vpop.f32.mrf.mxu0
  %v475 = vpop.f32.mrf.mxu0
  %v476 = vadd.f32 0.0, %v475
  %v477 = vpop.f32.mrf.mxu0
  %478 = vmatprep.mubr.bf16.mxu0 0
  %479 = vmatmul.mubr.bf16.gmra.mxu0 %v393
  %v480 = vpop.f32.mrf.mxu0
  %v481 = vadd.f32 0.0, %v480
  %v482 = vpop.f32.mrf.mxu0
  %v483 = vpop.f32.mrf.mxu0
  %v484 = vadd.f32 0.0, %v483
  %v485 = vpop.f32.mrf.mxu0
  %486 = vmatprep.mubr.bf16.mxu0 0
  %487 = vmatmul.mubr.bf16.gmra.mxu0 %v396
  %v488 = vpop.f32.mrf.mxu0
  %v489 = vadd.f32 0.0, %v488
  %v490 = vpop.f32.mrf.mxu0
  %v491 = vpop.f32.mrf.mxu0
  %v492 = vadd.f32 0.0, %v491
  %v493 = vpop.f32.mrf.mxu0
  %494 = vdwg.mxu0
  %v495 = vpack.c.bf16 %v436, %v433
  %v496 = vpack.c.bf16 %v444, %v441
  %v497 = vpack.c.bf16 %v452, %v449
  %v498 = vpack.c.bf16 %v460, %v457
  %v499 = vpack.c.bf16 %v468, %v465
  %v500 = vpack.c.bf16 %v476, %v473
  %v501 = vpack.c.bf16 %v484, %v481
  %v502 = vpack.c.bf16 %v492, %v489
  %v511 = vunpack.c.l.b16 %v495
  %v512 = vunpack.c.h.b16 %v495
  %v513 = vunpack.c.l.b16 %v496
  %v514 = vunpack.c.h.b16 %v496
  %v515 = vunpack.c.l.b16 %v497
  %v516 = vunpack.c.h.b16 %v497
  %v517 = vunpack.c.l.b16 %v498
  %v518 = vunpack.c.h.b16 %v498
  %v519 = vunpack.c.l.b16 %v499
  %v520 = vunpack.c.h.b16 %v499
  %v521 = vunpack.c.l.b16 %v500
  %v522 = vunpack.c.h.b16 %v500
  %v523 = vunpack.c.l.b16 %v501
  %v524 = vunpack.c.h.b16 %v501
  %v525 = vunpack.c.l.b16 %v502
  %v526 = vunpack.c.h.b16 %v502
  %v527 = vpack.c.b16 %v511, %v511
  %v528 = vpack.c.b16 %v512, %v512
  %v529 = vpack.c.b16 %v513, %v513
  %v530 = vpack.c.b16 %v514, %v514
  %v531 = vpack.c.b16 %v515, %v515
  %v532 = vpack.c.b16 %v516, %v516
  %v533 = vpack.c.b16 %v517, %v517
  %v534 = vpack.c.b16 %v518, %v518
  %v535 = vpack.c.b16 %v519, %v519
  %v536 = vpack.c.b16 %v520, %v520
  %v537 = vpack.c.b16 %v521, %v521
  %v538 = vpack.c.b16 %v522, %v522
  %v539 = vpack.c.b16 %v523, %v523
  %v540 = vpack.c.b16 %v524, %v524
  %v541 = vpack.c.b16 %v525, %v525
  %v542 = vpack.c.b16 %v526, %v526
  %559 = vst.msk [vmem:[%s7] sm:$0xf] %vm285, %v527
  %560 = vst.msk [vmem:[%s7 + $0x4] sm:$0xf] %vm285, %v528
  %561 = vst.msk [vmem:[%s7 + $0x8] sm:$0xf] %vm285, %v529
  %562 = vst.msk [vmem:[%s7 + $0xc] sm:$0xf] %vm285, %v530
  %563 = vst.msk [vmem:[%s7 + $0x10] sm:$0xf] %vm285, %v531
  %564 = vst.msk [vmem:[%s7 + $0x14] sm:$0xf] %vm285, %v532
  %565 = vst.msk [vmem:[%s7 + $0x18] sm:$0xf] %vm285, %v533
  %566 = vst.msk [vmem:[%s7 + $0x1c] sm:$0xf] %vm285, %v534
  %567 = vst.msk [vmem:[%s7 + $0x20] sm:$0xf] %vm285, %v535
  %568 = vst.msk [vmem:[%s7 + $0x24] sm:$0xf] %vm285, %v536
  %569 = vst.msk [vmem:[%s7 + $0x28] sm:$0xf] %vm285, %v537
  %570 = vst.msk [vmem:[%s7 + $0x2c] sm:$0xf] %vm285, %v538
  %571 = vst.msk [vmem:[%s7 + $0x30] sm:$0xf] %vm285, %v539
  %572 = vst.msk [vmem:[%s7 + $0x34] sm:$0xf] %vm285, %v540
  %573 = vst.msk [vmem:[%s7 + $0x38] sm:$0xf] %vm285, %v541
  %574 = vst.msk [vmem:[%s7 + $0x3c] sm:$0xf] %vm285, %v542
  %v575 = vld [vmem:[%s2] sm:$0xff]
  %v576 = vld [vmem:[%s2 + $0x8] sm:$0xff]
  %v577 = vld [vmem:[%s2 + $0x10] sm:$0xff]
  %v578 = vld [vmem:[%s2 + $0x18] sm:$0xff]
  %v579 = vld [vmem:[%s2 + $0x20] sm:$0xff]
  %v580 = vld [vmem:[%s2 + $0x28] sm:$0xff]
  %v581 = vld [vmem:[%s2 + $0x30] sm:$0xff]
  %v582 = vld [vmem:[%s2 + $0x38] sm:$0xff]
  %v583 = vld [vmem:[%s2 + $0x40] sm:$0xff]
  %v584 = vld [vmem:[%s2 + $0x48] sm:$0xff]
  %v585 = vld [vmem:[%s2 + $0x50] sm:$0xff]
  %v586 = vld [vmem:[%s2 + $0x58] sm:$0xff]
  %v587 = vld [vmem:[%s2 + $0x60] sm:$0xff]
  %v588 = vld [vmem:[%s2 + $0x68] sm:$0xff]
  %v589 = vld [vmem:[%s2 + $0x70] sm:$0xff]
  %v590 = vld [vmem:[%s2 + $0x78] sm:$0xff]
  %v591 = vpack.c.bf16 %v576, %v575
  %v592 = vpack.c.bf16 %v578, %v577
  %v593 = vpack.c.bf16 %v580, %v579
  %v594 = vpack.c.bf16 %v582, %v581
  %v595 = vpack.c.bf16 %v584, %v583
  %v596 = vpack.c.bf16 %v586, %v585
  %v597 = vpack.c.bf16 %v588, %v587
  %v598 = vpack.c.bf16 %v590, %v589
  %v599 = vld [vmem:[%s5] sm:$0xf]
  %v600 = vld [vmem:[%s5 + $0x4] sm:$0xf]
  %v601 = vld [vmem:[%s5 + $0x8] sm:$0xf]
  %v602 = vld [vmem:[%s5 + $0xc] sm:$0xf]
  %v607 = vunpack.c.l.b16 %v599
  %v608 = vunpack.c.l.b16 %v600
  %v609 = vunpack.c.l.b16 %v601
  %v610 = vunpack.c.l.b16 %v602
  %v611 = vpack.c.b16 %v608, %v607
  %v612 = vpack.c.b16 %v610, %v609
  %v616 = vsel %vm99, %v591, 0
  %v619 = vsel %vm99, %v592, 0
  %v622 = vsel %vm99, %v593, 0
  %v625 = vsel %vm99, %v594, 0
  %v628 = vsel %vm99, %v595, 0
  %v631 = vsel %vm99, %v596, 0
  %v634 = vsel %vm99, %v597, 0
  %v637 = vsel %vm99, %v598, 0
  %639 = vmatprep.subr.bf16.mxu0 0
  %640 = vmatpush1.bf16.msra.mxu0 0
  %641 = vmatprep.subr.bf16.mxu0 0
  %642 = vmatpush1.bf16.msra.mxu0 0
  %643 = vmatprep.subr.bf16.mxu0 0
  %644 = vmatpush1.bf16.msra.mxu0 0
  %645 = vmatprep.subr.bf16.mxu0 0
  %646 = vmatpush1.bf16.msra.mxu0 0
  %647 = vmatprep.subr.bf16.mxu0 0
  %648 = vmatpush1.bf16.msra.mxu0 0
  %649 = vmatprep.subr.bf16.mxu0 0
  %650 = vmatpush1.bf16.msra.mxu0 0
  %651 = vmatprep.subr.bf16.mxu0 0
  %652 = vmatpush1.bf16.msra.mxu0 %v612
  %653 = vmatprep.subr.bf16.mxu0 0
  %654 = vmatpush1.bf16.msra.mxu0 %v611
  %655 = vmatprep.subr.bf16.mxu0 0
  %656 = vmatpush2.bf16.msra.mxu0 0
  %657 = vmatprep.subr.bf16.mxu0 0
  %658 = vmatpush2.bf16.msra.mxu0 0
  %659 = vmatprep.subr.bf16.mxu0 0
  %660 = vmatpush2.bf16.msra.mxu0 0
  %661 = vmatprep.subr.bf16.mxu0 0
  %662 = vmatpush2.bf16.msra.mxu0 0
  %663 = vmatprep.subr.bf16.mxu0 0
  %664 = vmatpush2.bf16.msra.mxu0 0
  %665 = vmatprep.subr.bf16.mxu0 0
  %666 = vmatpush2.bf16.msra.mxu0 0
  %667 = vmatprep.subr.bf16.mxu0 0
  %668 = vmatpush2.bf16.msra.mxu0 0
  %669 = vmatprep.subr.bf16.mxu0 0
  %670 = vmatpush2.bf16.msra.mxu0 0
  %671 = vmatprep.mubr.bf16.mxu0 0
  %672 = vmatmul.mubr.bf16.gmra.mxu0 %v616
  %v673 = vpop.f32.mrf.mxu0
  %v674 = vadd.f32 0.0, %v673
  %v675 = vpop.f32.mrf.mxu0
  %v676 = vpop.f32.mrf.mxu0
  %v677 = vadd.f32 0.0, %v676
  %v678 = vpop.f32.mrf.mxu0
  %679 = vmatprep.mubr.bf16.mxu0 0
  %680 = vmatmul.mubr.bf16.gmra.mxu0 %v619
  %v681 = vpop.f32.mrf.mxu0
  %v682 = vadd.f32 0.0, %v681
  %v683 = vpop.f32.mrf.mxu0
  %v684 = vpop.f32.mrf.mxu0
  %v685 = vadd.f32 0.0, %v684
  %v686 = vpop.f32.mrf.mxu0
  %687 = vmatprep.mubr.bf16.mxu0 0
  %688 = vmatmul.mubr.bf16.gmra.mxu0 %v622
  %v689 = vpop.f32.mrf.mxu0
  %v690 = vadd.f32 0.0, %v689
  %v691 = vpop.f32.mrf.mxu0
  %v692 = vpop.f32.mrf.mxu0
  %v693 = vadd.f32 0.0, %v692
  %v694 = vpop.f32.mrf.mxu0
  %695 = vmatprep.mubr.bf16.mxu0 0
  %696 = vmatmul.mubr.bf16.gmra.mxu0 %v625
  %v697 = vpop.f32.mrf.mxu0
  %v698 = vadd.f32 0.0, %v697
  %v699 = vpop.f32.mrf.mxu0
  %v700 = vpop.f32.mrf.mxu0
  %v701 = vadd.f32 0.0, %v700
  %v702 = vpop.f32.mrf.mxu0
  %703 = vmatprep.mubr.bf16.mxu0 0
  %704 = vmatmul.mubr.bf16.gmra.mxu0 %v628
  %v705 = vpop.f32.mrf.mxu0
  %v706 = vadd.f32 0.0, %v705
  %v707 = vpop.f32.mrf.mxu0
  %v708 = vpop.f32.mrf.mxu0
  %v709 = vadd.f32 0.0, %v708
  %v710 = vpop.f32.mrf.mxu0
  %711 = vmatprep.mubr.bf16.mxu0 0
  %712 = vmatmul.mubr.bf16.gmra.mxu0 %v631
  %v713 = vpop.f32.mrf.mxu0
  %v714 = vadd.f32 0.0, %v713
  %v715 = vpop.f32.mrf.mxu0
  %v716 = vpop.f32.mrf.mxu0
  %v717 = vadd.f32 0.0, %v716
  %v718 = vpop.f32.mrf.mxu0
  %719 = vmatprep.mubr.bf16.mxu0 0
  %720 = vmatmul.mubr.bf16.gmra.mxu0 %v634
  %v721 = vpop.f32.mrf.mxu0
  %v722 = vadd.f32 0.0, %v721
  %v723 = vpop.f32.mrf.mxu0
  %v724 = vpop.f32.mrf.mxu0
  %v725 = vadd.f32 0.0, %v724
  %v726 = vpop.f32.mrf.mxu0
  %727 = vmatprep.mubr.bf16.mxu0 0
  %728 = vmatmul.mubr.bf16.gmra.mxu0 %v637
  %v729 = vpop.f32.mrf.mxu0
  %v730 = vadd.f32 0.0, %v729
  %v731 = vpop.f32.mrf.mxu0
  %v732 = vpop.f32.mrf.mxu0
  %v733 = vadd.f32 0.0, %v732
  %v734 = vpop.f32.mrf.mxu0
  %735 = vdwg.mxu0
  %v736 = vpack.c.bf16 %v677, %v674
  %v737 = vpack.c.bf16 %v685, %v682
  %v738 = vpack.c.bf16 %v693, %v690
  %v739 = vpack.c.bf16 %v701, %v698
  %v740 = vpack.c.bf16 %v709, %v706
  %v741 = vpack.c.bf16 %v717, %v714
  %v742 = vpack.c.bf16 %v725, %v722
  %v743 = vpack.c.bf16 %v733, %v730
  %v752 = vunpack.c.l.b16 %v736
  %v753 = vunpack.c.h.b16 %v736
  %v754 = vunpack.c.l.b16 %v737
  %v755 = vunpack.c.h.b16 %v737
  %v756 = vunpack.c.l.b16 %v738
  %v757 = vunpack.c.h.b16 %v738
  %v758 = vunpack.c.l.b16 %v739
  %v759 = vunpack.c.h.b16 %v739
  %v760 = vunpack.c.l.b16 %v740
  %v761 = vunpack.c.h.b16 %v740
  %v762 = vunpack.c.l.b16 %v741
  %v763 = vunpack.c.h.b16 %v741
  %v764 = vunpack.c.l.b16 %v742
  %v765 = vunpack.c.h.b16 %v742
  %v766 = vunpack.c.l.b16 %v743
  %v767 = vunpack.c.h.b16 %v743
  %v768 = vpack.c.b16 %v752, %v752
  %v769 = vpack.c.b16 %v753, %v753
  %v770 = vpack.c.b16 %v754, %v754
  %v771 = vpack.c.b16 %v755, %v755
  %v772 = vpack.c.b16 %v756, %v756
  %v773 = vpack.c.b16 %v757, %v757
  %v774 = vpack.c.b16 %v758, %v758
  %v775 = vpack.c.b16 %v759, %v759
  %v776 = vpack.c.b16 %v760, %v760
  %v777 = vpack.c.b16 %v761, %v761
  %v778 = vpack.c.b16 %v762, %v762
  %v779 = vpack.c.b16 %v763, %v763
  %v780 = vpack.c.b16 %v764, %v764
  %v781 = vpack.c.b16 %v765, %v765
  %v782 = vpack.c.b16 %v766, %v766
  %v783 = vpack.c.b16 %v767, %v767
  %800 = vst.msk [vmem:[%s8] sm:$0xf] %vm285, %v768
  %801 = vst.msk [vmem:[%s8 + $0x4] sm:$0xf] %vm285, %v769
  %802 = vst.msk [vmem:[%s8 + $0x8] sm:$0xf] %vm285, %v770
  %803 = vst.msk [vmem:[%s8 + $0xc] sm:$0xf] %vm285, %v771
  %804 = vst.msk [vmem:[%s8 + $0x10] sm:$0xf] %vm285, %v772
  %805 = vst.msk [vmem:[%s8 + $0x14] sm:$0xf] %vm285, %v773
  %806 = vst.msk [vmem:[%s8 + $0x18] sm:$0xf] %vm285, %v774
  %807 = vst.msk [vmem:[%s8 + $0x1c] sm:$0xf] %vm285, %v775
  %808 = vst.msk [vmem:[%s8 + $0x20] sm:$0xf] %vm285, %v776
  %809 = vst.msk [vmem:[%s8 + $0x24] sm:$0xf] %vm285, %v777
  %810 = vst.msk [vmem:[%s8 + $0x28] sm:$0xf] %vm285, %v778
  %811 = vst.msk [vmem:[%s8 + $0x2c] sm:$0xf] %vm285, %v779
  %812 = vst.msk [vmem:[%s8 + $0x30] sm:$0xf] %vm285, %v780
  %813 = vst.msk [vmem:[%s8 + $0x34] sm:$0xf] %vm285, %v781
  %814 = vst.msk [vmem:[%s8 + $0x38] sm:$0xf] %vm285, %v782
  %815 = vst.msk [vmem:[%s8 + $0x3c] sm:$0xf] %vm285, %v783
  // Predicated region
  $region26: #{weighted_permute_mlp.2} parent=0 // pred_check
    _
  $region27: #{weighted_permute_mlp.2} parent=0 // pred_check_branch
    %817 = sbr.rel (0) target = $region29
  $region28: #{weighted_permute_mlp.2} parent=0 // pred_region
    _
  $region29: #{weighted_permute_mlp.2} parent=0 // pred_fallthru
    _
  // Predicated region
  $region30: #{weighted_permute_mlp.2} parent=0 // pred_check
    _
  $region31: #{weighted_permute_mlp.2} parent=0 // pred_check_branch
    %819 = sbr.rel (0) target = $region33
  $region32: #{weighted_permute_mlp.2} parent=0 // pred_region
    _
  $region33: #{weighted_permute_mlp.2} parent=0 // pred_fallthru
    _
  // Predicated region
  $region34: #{weighted_permute_mlp.2} parent=0 // pred_check
    _
  $region35: #{weighted_permute_mlp.2} parent=0 // pred_check_branch
    %821 = sbr.rel (0) target = $region37
  $region36: #{weighted_permute_mlp.2} parent=0 // pred_region
    _
  $region37: #{weighted_permute_mlp.2} parent=0 // pred_fallthru
    _
  // Predicated region
  $region38: #{weighted_permute_mlp.2} parent=0 // pred_check
    _
  $region39: #{weighted_permute_mlp.2} parent=0 // pred_check_branch
    %823 = sbr.rel (0) target = $region41
  $region40: #{weighted_permute_mlp.2} parent=0 // pred_region
    _
  $region41: #{weighted_permute_mlp.2} parent=0 // pred_fallthru
    _
  // Predicated region
  $region42: #{weighted_permute_mlp.2} parent=0 // pred_check
    _
  $region43: #{weighted_permute_mlp.2} parent=0 // pred_check_branch
    %825 = sbr.rel (0) target = $region45
  $region44: #{weighted_permute_mlp.2} parent=0 // pred_region
    _
  $region45: #{weighted_permute_mlp.2} parent=0 // pred_fallthru
    _
  // Predicated region
  $region46: #{weighted_permute_mlp.2} parent=0 // pred_check
    _
  $region47: #{weighted_permute_mlp.2} parent=0 // pred_check_branch
    %827 = sbr.rel (0) target = $region49
  $region48: #{weighted_permute_mlp.2} parent=0 // pred_region
    _
  $region49: #{weighted_permute_mlp.2} parent=0 // pred_fallthru
    _

// kernel: weighted_permute_mlp.3
$region0: #{weighted_permute_mlp.3}
  #allocation0 [shape = 'u32[]', space=smem, size = 0x4, offset = 0x4, fixed_abs, tag = 'smem constant byte address 0x4 - core index']
  #allocation1 [shape = 'u32[144,128]{1,0:T(1,128)}', space=vmem, size = 0x12000, scoped, tag = 'internal scratch']
  %s0 = inlined_call_operand.vmem [shape: bf16[2,64,32], index: 0, kind: input, shape index: {}]
  %s1 = inlined_call_operand.vmem [shape: bf16[2,64,32], index: 1, kind: input, shape index: {}]
  %s2 = inlined_call_operand.vmem [shape: bf16[2,64,32], index: 2, kind: input, shape index: {}]
  %s3 = inlined_call_operand.vmem [shape: f32[32,8], index: 3, kind: input, shape index: {}]
  %s4 = inlined_call_operand.vmem [shape: f32[1,8], index: 4, kind: input, shape index: {}]
  %s5 = inlined_call_operand.vmem [shape: f32[8,96], index: 5, kind: input, shape index: {}]
  %s6 = inlined_call_operand.vmem [shape: f32[1,96], index: 6, kind: input, shape index: {}]
  %s7 = inlined_call_operand.vmem [shape: bf16[32,32], index: 7, kind: input, shape index: {}]
  %s8 = inlined_call_operand.vmem [shape: f32[1,32], index: 8, kind: input, shape index: {}]
  %s9 = inlined_call_operand.hbm [shape: f32[2,64,32], index: 9, kind: output, shape index: {}]
  %s10 = sld [smem:[#allocation0]]
  $region69: #{weighted_permute_mlp.3} parent=0
    _
  %s12 = ssub.s32 1, %s10
  %s13 = scalar_select 0, %s12, %s10
  $region1: #{weighted_permute_mlp.3} parent=0
    #allocation2 [shape = 'u8[65536]{0}', space=vmem, size = 0x10000, scoped, tag = 'output window, operand 0']
    #allocation3 [shape = 's32[2]{0}', space=sflag, size = 0x8, scoped, tag = 'scoped memory for weighted_permute_mlp.3']
    %14 = vsyncpa [#allocation3], 0
    %s15 = scalar_lea.sflag [#allocation3], 1
    %16 = vsyncpa %s15, 0
    loop: start=0, step=1, limit=4
    $region2: #{weighted_permute_mlp.3} parent=1 // loop_pre_header
      _
    $region3: #{weighted_permute_mlp.3} parent=1 // loop_header
      %s18 = sphi 0, %s22
      %p19 = scmp.ge.s32.totalorder %s18, 4
      %s28 = sphi 0, %s30
      %s31 = sphi 0, %s28
      %s32 = sphi 0, %s31
      %s48 = sphi 0, %s32
      %s54 = sphi 0, %s56
      %s57 = sphi 0, %s54
      %s58 = sphi 0, %s57
      %s74 = sphi 0, %s58
      %s80 = sphi 0, %s82
      %s83 = sphi 0, %s80
      %s84 = sphi 0, %s83
      %s100 = sphi 0, %s84
      %s104 = sphi 0, %s104
      %s106 = sphi 0, %s104
      %s107 = sphi 0, %s106
      %s121 = sphi 0, %s107
      %s125 = sphi 0, %s125
      %s127 = sphi 0, %s125
      %s128 = sphi 0, %s127
      %s142 = sphi 0, %s128
      %s146 = sphi 0, %s146
      %s148 = sphi 0, %s146
      %s149 = sphi 0, %s148
      %s163 = sphi 0, %s149
      %s167 = sphi 0, %s167
      %s169 = sphi 0, %s167
      %s170 = sphi 0, %s169
      %s184 = sphi 0, %s170
      %s188 = sphi 0, %s188
      %s190 = sphi 0, %s188
      %s191 = sphi 0, %s190
      %s205 = sphi 0, %s191
      %s209 = sphi 0, %s209
      %s211 = sphi 0, %s209
      %s212 = sphi 0, %s211
      %s226 = sphi 0, %s212
      %s232 = sphi 0, %s234
      %s235 = sphi 0, %s232
      %s236 = sphi 0, %s235
      %s252 = sphi 0, %s236
    $region4: #{weighted_permute_mlp.3} parent=1 // loop_header_branch
      %21 = sbr.rel (%p19) target = $region8
    $region5: #{weighted_permute_mlp.3} parent=1 // loop_body
      %s23 = ssub.s32 %s18, 1
      %s24 = ssub.s32 %s18, 2
      %s25 = sadd.s32 %s18, 1
      %s26 = ssub.s32 %s18, %s25
      %p27 = scmp.eq.s32.totalorder %s26, 0
      %s29 = sadd.s32 %s28, 1
      %s30 = scalar_select %p27, %s28, %s29
      %p33 = pneg %p27
      %p34 = scmp.eq.s32.totalorder %s18, 1
      %p35 = por %p33, %p34
      %p36 = scmp.ne.s32.totalorder %s28, %s31
      %p37 = scmp.eq.s32.totalorder %s18, 0
      %p38 = por %p36, %p37
      %p39 = scmp.ne.s32.totalorder %s28, %s31
      %p40 = scmp.eq.s32.totalorder %s23, 1
      %p41 = por %p39, %p40
      %p42 = scmp.ne.s32.totalorder %s31, %s32
      %p43 = scmp.eq.s32.totalorder %s23, 0
      %p44 = por %p42, %p43
      %p45 = scmp.ne.s32.totalorder %s31, %s32
      %p46 = scmp.eq.s32.totalorder %s24, 1
      %p47 = por %p45, %p46
      %p49 = scmp.ne.s32.totalorder %s32, %s48
      %p50 = scmp.eq.s32.totalorder %s24, 0
      %p51 = por %p49, %p50
      %s52 = ssub.s32 %s18, %s25
      %p53 = scmp.eq.s32.totalorder %s52, 0
      %s55 = sadd.s32 %s54, 1
      %s56 = scalar_select %p53, %s54, %s55
      %p59 = pneg %p53
      %p60 = scmp.eq.s32.totalorder %s18, 1
      %p61 = por %p59, %p60
      %p62 = scmp.ne.s32.totalorder %s54, %s57
      %p63 = scmp.eq.s32.totalorder %s18, 0
      %p64 = por %p62, %p63
      %p65 = scmp.ne.s32.totalorder %s54, %s57
      %p66 = scmp.eq.s32.totalorder %s23, 1
      %p67 = por %p65, %p66
      %p68 = scmp.ne.s32.totalorder %s57, %s58
      %p69 = scmp.eq.s32.totalorder %s23, 0
      %p70 = por %p68, %p69
      %p71 = scmp.ne.s32.totalorder %s57, %s58
      %p72 = scmp.eq.s32.totalorder %s24, 1
      %p73 = por %p71, %p72
      %p75 = scmp.ne.s32.totalorder %s58, %s74
      %p76 = scmp.eq.s32.totalorder %s24, 0
      %p77 = por %p75, %p76
      %s78 = ssub.s32 %s18, %s25
      %p79 = scmp.eq.s32.totalorder %s78, 0
      %s81 = sadd.s32 %s80, 1
      %s82 = scalar_select %p79, %s80, %s81
      %p85 = pneg %p79
      %p86 = scmp.eq.s32.totalorder %s18, 1
      %p87 = por %p85, %p86
      %p88 = scmp.ne.s32.totalorder %s80, %s83
      %p89 = scmp.eq.s32.totalorder %s18, 0
      %p90 = por %p88, %p89
      %p91 = scmp.ne.s32.totalorder %s80, %s83
      %p92 = scmp.eq.s32.totalorder %s23, 1
      %p93 = por %p91, %p92
      %p94 = scmp.ne.s32.totalorder %s83, %s84
      %p95 = scmp.eq.s32.totalorder %s23, 0
      %p96 = por %p94, %p95
      %p97 = scmp.ne.s32.totalorder %s83, %s84
      %p98 = scmp.eq.s32.totalorder %s24, 1
      %p99 = por %p97, %p98
      %p101 = scmp.ne.s32.totalorder %s84, %s100
      %p102 = scmp.eq.s32.totalorder %s24, 0
      %p103 = por %p101, %p102
      %s105 = sadd.s32 %s104, 1
      %p108 = scmp.eq.s32.totalorder %s18, 1
      %p109 = scmp.ne.s32.totalorder %s104, %s106
      %p110 = scmp.eq.s32.totalorder %s18, 0
      %p111 = por %p109, %p110
      %p112 = scmp.ne.s32.totalorder %s104, %s106
      %p113 = scmp.eq.s32.totalorder %s23, 1
      %p114 = por %p112, %p113
      %p115 = scmp.ne.s32.totalorder %s106, %s107
      %p116 = scmp.eq.s32.totalorder %s23, 0
      %p117 = por %p115, %p116
      %p118 = scmp.ne.s32.totalorder %s106, %s107
      %p119 = scmp.eq.s32.totalorder %s24, 1
      %p120 = por %p118, %p119
      %p122 = scmp.ne.s32.totalorder %s107, %s121
      %p123 = scmp.eq.s32.totalorder %s24, 0
      %p124 = por %p122, %p123
      %s126 = sadd.s32 %s125, 1
      %p129 = scmp.eq.s32.totalorder %s18, 1
      %p130 = scmp.ne.s32.totalorder %s125, %s127
      %p131 = scmp.eq.s32.totalorder %s18, 0
      %p132 = por %p130, %p131
      %p133 = scmp.ne.s32.totalorder %s125, %s127
      %p134 = scmp.eq.s32.totalorder %s23, 1
      %p135 = por %p133, %p134
      %p136 = scmp.ne.s32.totalorder %s127, %s128
      %p137 = scmp.eq.s32.totalorder %s23, 0
      %p138 = por %p136, %p137
      %p139 = scmp.ne.s32.totalorder %s127, %s128
      %p140 = scmp.eq.s32.totalorder %s24, 1
      %p141 = por %p139, %p140
      %p143 = scmp.ne.s32.totalorder %s128, %s142
      %p144 = scmp.eq.s32.totalorder %s24, 0
      %p145 = por %p143, %p144
      %s147 = sadd.s32 %s146, 1
      %p150 = scmp.eq.s32.totalorder %s18, 1
      %p151 = scmp.ne.s32.totalorder %s146, %s148
      %p152 = scmp.eq.s32.totalorder %s18, 0
      %p153 = por %p151, %p152
      %p154 = scmp.ne.s32.totalorder %s146, %s148
      %p155 = scmp.eq.s32.totalorder %s23, 1
      %p156 = por %p154, %p155
      %p157 = scmp.ne.s32.totalorder %s148, %s149
      %p158 = scmp.eq.s32.totalorder %s23, 0
      %p159 = por %p157, %p158
      %p160 = scmp.ne.s32.totalorder %s148, %s149
      %p161 = scmp.eq.s32.totalorder %s24, 1
      %p162 = por %p160, %p161
      %p164 = scmp.ne.s32.totalorder %s149, %s163
      %p165 = scmp.eq.s32.totalorder %s24, 0
      %p166 = por %p164, %p165
      %s168 = sadd.s32 %s167, 1
      %p171 = scmp.eq.s32.totalorder %s18, 1
      %p172 = scmp.ne.s32.totalorder %s167, %s169
      %p173 = scmp.eq.s32.totalorder %s18, 0
      %p174 = por %p172, %p173
      %p175 = scmp.ne.s32.totalorder %s167, %s169
      %p176 = scmp.eq.s32.totalorder %s23, 1
      %p177 = por %p175, %p176
      %p178 = scmp.ne.s32.totalorder %s169, %s170
      %p179 = scmp.eq.s32.totalorder %s23, 0
      %p180 = por %p178, %p179
      %p181 = scmp.ne.s32.totalorder %s169, %s170
      %p182 = scmp.eq.s32.totalorder %s24, 1
      %p183 = por %p181, %p182
      %p185 = scmp.ne.s32.totalorder %s170, %s184
      %p186 = scmp.eq.s32.totalorder %s24, 0
      %p187 = por %p185, %p186
      %s189 = sadd.s32 %s188, 1
      %p192 = scmp.eq.s32.totalorder %s18, 1
      %p193 = scmp.ne.s32.totalorder %s188, %s190
      %p194 = scmp.eq.s32.totalorder %s18, 0
      %p195 = por %p193, %p194
      %p196 = scmp.ne.s32.totalorder %s188, %s190
      %p197 = scmp.eq.s32.totalorder %s23, 1
      %p198 = por %p196, %p197
      %p199 = scmp.ne.s32.totalorder %s190, %s191
      %p200 = scmp.eq.s32.totalorder %s23, 0
      %p201 = por %p199, %p200
      %p202 = scmp.ne.s32.totalorder %s190, %s191
      %p203 = scmp.eq.s32.totalorder %s24, 1
      %p204 = por %p202, %p203
      %p206 = scmp.ne.s32.totalorder %s191, %s205
      %p207 = scmp.eq.s32.totalorder %s24, 0
      %p208 = por %p206, %p207
      %s210 = sadd.s32 %s209, 1
      %p213 = scmp.eq.s32.totalorder %s18, 1
      %p214 = scmp.ne.s32.totalorder %s209, %s211
      %p215 = scmp.eq.s32.totalorder %s18, 0
      %p216 = por %p214, %p215
      %p217 = scmp.ne.s32.totalorder %s209, %s211
      %p218 = scmp.eq.s32.totalorder %s23, 1
      %p219 = por %p217, %p218
      %p220 = scmp.ne.s32.totalorder %s211, %s212
      %p221 = scmp.eq.s32.totalorder %s23, 0
      %p222 = por %p220, %p221
      %p223 = scmp.ne.s32.totalorder %s211, %s212
      %p224 = scmp.eq.s32.totalorder %s24, 1
      %p225 = por %p223, %p224
      %p227 = scmp.ne.s32.totalorder %s212, %s226
      %p228 = scmp.eq.s32.totalorder %s24, 0
      %p229 = por %p227, %p228
      %s230 = ssub.s32 %s18, %s25
      %p231 = scmp.eq.s32.totalorder %s230, 0
      %s233 = sadd.s32 %s232, 1
      %s234 = scalar_select %p231, %s232, %s233
      %p237 = pneg %p231
      %p238 = scmp.eq.s32.totalorder %s18, 1
      %p239 = por %p237, %p238
      %p240 = scmp.ne.s32.totalorder %s232, %s235
      %p241 = scmp.eq.s32.totalorder %s18, 0
      %p242 = por %p240, %p241
      %p243 = scmp.ne.s32.totalorder %s232, %s235
      %p244 = scmp.eq.s32.totalorder %s23, 1
      %p245 = por %p243, %p244
      %p246 = scmp.ne.s32.totalorder %s235, %s236
      %p247 = scmp.eq.s32.totalorder %s23, 0
      %p248 = por %p246, %p247
      %p249 = scmp.ne.s32.totalorder %s235, %s236
      %p250 = scmp.eq.s32.totalorder %s24, 1
      %p251 = por %p249, %p250
      %p253 = scmp.ne.s32.totalorder %s236, %s252
      %p254 = scmp.eq.s32.totalorder %s24, 0
      %p255 = por %p253, %p254
      %p256 = scmp.le.s32.totalorder 1, %s18
      %p257 = scmp.lt.s32.totalorder %s18, 3
      %p258 = pnand %p256, %p257
      %p259 = pneg %p258
      // Predicated region
      $region9: #{weighted_permute_mlp.3} parent=5 // pred_check
        _
      $region10: #{weighted_permute_mlp.3} parent=5 // pred_check_branch
        %261 = sbr.rel (%p258) target = $region12
      $region11: #{weighted_permute_mlp.3} parent=5 // pred_region
        %s262 = ssub.s32 %s18, 1
        // Predicated region
        $region13: #{weighted_permute_mlp.3} parent=11 // pred_check
          %p263 = pneg %p117
        $region14: #{weighted_permute_mlp.3} parent=11 // pred_check_branch
          %265 = sbr.rel (%p263) target = $region16
        $region15: #{weighted_permute_mlp.3} parent=11 // pred_region
          _
        $region16: #{weighted_permute_mlp.3} parent=11 // pred_fallthru
          _
        // Predicated region
        $region17: #{weighted_permute_mlp.3} parent=11 // pred_check
          %p266 = pneg %p138
        $region18: #{weighted_permute_mlp.3} parent=11 // pred_check_branch
          %268 = sbr.rel (%p266) target = $region20
        $region19: #{weighted_permute_mlp.3} parent=11 // pred_region
          _
        $region20: #{weighted_permute_mlp.3} parent=11 // pred_fallthru
          _
        // Predicated region
        $region21: #{weighted_permute_mlp.3} parent=11 // pred_check
          %p269 = pneg %p159
        $region22: #{weighted_permute_mlp.3} parent=11 // pred_check_branch
          %271 = sbr.rel (%p269) target = $region24
        $region23: #{weighted_permute_mlp.3} parent=11 // pred_region
          _
        $region24: #{weighted_permute_mlp.3} parent=11 // pred_fallthru
          _
        // Predicated region
        $region25: #{weighted_permute_mlp.3} parent=11 // pred_check
          %p272 = pneg %p180
        $region26: #{weighted_permute_mlp.3} parent=11 // pred_check_branch
          %274 = sbr.rel (%p272) target = $region28
        $region27: #{weighted_permute_mlp.3} parent=11 // pred_region
          _
        $region28: #{weighted_permute_mlp.3} parent=11 // pred_fallthru
          _
        // Predicated region
        $region29: #{weighted_permute_mlp.3} parent=11 // pred_check
          %p275 = pneg %p201
        $region30: #{weighted_permute_mlp.3} parent=11 // pred_check_branch
          %277 = sbr.rel (%p275) target = $region32
        $region31: #{weighted_permute_mlp.3} parent=11 // pred_region
          _
        $region32: #{weighted_permute_mlp.3} parent=11 // pred_fallthru
          _
        // Predicated region
        $region33: #{weighted_permute_mlp.3} parent=11 // pred_check
          %p278 = pneg %p222
        $region34: #{weighted_permute_mlp.3} parent=11 // pred_check_branch
          %280 = sbr.rel (%p278) target = $region36
        $region35: #{weighted_permute_mlp.3} parent=11 // pred_region
          _
        $region36: #{weighted_permute_mlp.3} parent=11 // pred_fallthru
          _
      $region12: #{weighted_permute_mlp.3} parent=5 // pred_fallthru
        _
      %p281 = scmp.lt.s32.totalorder %s18, 2
      // Predicated region
      $region37: #{weighted_permute_mlp.3} parent=5 // pred_check
        %p282 = pneg %p281
      $region38: #{weighted_permute_mlp.3} parent=5 // pred_check_branch
        %284 = sbr.rel (%p282) target = $region40
      $region39: #{weighted_permute_mlp.3} parent=5 // pred_region
        // Predicated region
        $region41: #{weighted_permute_mlp.3} parent=39 // pred_check
          %p285 = pneg %p38
        $region42: #{weighted_permute_mlp.3} parent=39 // pred_check_branch
          %287 = sbr.rel (%p285) target = $region44
        $region43: #{weighted_permute_mlp.3} parent=39 // pred_region
          %p288 = scmp.lt.s32.totalorder %s18, 1
          %s289 = scalar_select %p288, %s18, 1
          %s290 = smul.addr %s289, 8
          %s291 = smul.addr %s290, 4
          %s292 = scalar_lea.vmem %s0, %s291
        $region44: #{weighted_permute_mlp.3} parent=39 // pred_fallthru
          _
        // Predicated region
        $region45: #{weighted_permute_mlp.3} parent=39 // pred_check
          %p293 = pneg %p64
        $region46: #{weighted_permute_mlp.3} parent=39 // pred_check_branch
          %295 = sbr.rel (%p293) target = $region48
        $region47: #{weighted_permute_mlp.3} parent=39 // pred_region
          %p296 = scmp.lt.s32.totalorder %s18, 1
          %s297 = scalar_select %p296, %s18, 1
          %s298 = smul.addr %s297, 8
          %s299 = smul.addr %s298, 4
          %s300 = scalar_lea.vmem %s1, %s299
        $region48: #{weighted_permute_mlp.3} parent=39 // pred_fallthru
          _
        // Predicated region
        $region49: #{weighted_permute_mlp.3} parent=39 // pred_check
          %p301 = pneg %p90
        $region50: #{weighted_permute_mlp.3} parent=39 // pred_check_branch
          %303 = sbr.rel (%p301) target = $region52
        $region51: #{weighted_permute_mlp.3} parent=39 // pred_region
          %p304 = scmp.lt.s32.totalorder %s18, 1
          %s305 = scalar_select %p304, %s18, 1
          %s306 = smul.addr %s305, 8
          %s307 = smul.addr %s306, 4
          %s308 = scalar_lea.vmem %s2, %s307
        $region52: #{weighted_permute_mlp.3} parent=39 // pred_fallthru
          _
      $region40: #{weighted_permute_mlp.3} parent=5 // pred_fallthru
        _
      %p309 = scmp.le.s32.totalorder 1, %s18
      %p310 = scmp.lt.s32.totalorder %s18, 3
      %p311 = pnand %p309, %p310
      %p312 = pneg %p311
      // Predicated region
      $region53: #{weighted_permute_mlp.3} parent=5 // pred_check
        _
      $region54: #{weighted_permute_mlp.3} parent=5 // pred_check_branch
        %314 = sbr.rel (%p311) target = $region56
      $region55: #{weighted_permute_mlp.3} parent=5 // pred_region
        %s315 = ssub.s32 %s18, 1
        %p316 = scmp.lt.s32.totalorder %s23, 1
        %s317 = scalar_select %p316, %s23, 1
        %s318 = smul.addr %s317, 8
        %s319 = smul.addr %s318, 4
        %s320 = scalar_lea.vmem %s0, %s319
        %p321 = pneg %p44
        %p322 = pneg %p41
        %p323 = scmp.lt.s32.totalorder %s23, 1
        %s324 = scalar_select %p323, %s23, 1
        %s325 = smul.addr %s324, 8
        %s326 = smul.addr %s325, 4
        %s327 = scalar_lea.vmem %s1, %s326
        %p328 = pneg %p70
        %p329 = pneg %p67
        %p330 = scmp.lt.s32.totalorder %s23, 1
        %s331 = scalar_select %p330, %s23, 1
        %s332 = smul.addr %s331, 8
        %s333 = smul.addr %s332, 4
        %s334 = scalar_lea.vmem %s2, %s333
        %p335 = pneg %p96
        %p336 = pneg %p93
        %p337 = pneg %p117
        %p338 = pneg %p114
        %p339 = pneg %p138
        %p340 = pneg %p135
        %p341 = pneg %p159
        %p342 = pneg %p156
        %p343 = pneg %p180
        %p344 = pneg %p177
        %p345 = pneg %p201
        %p346 = pneg %p198
        %p347 = pneg %p222
        %p348 = pneg %p219
        %p349 = pneg %p248
        %p350 = pneg %p245
        %s351 = sand.u32 %s235, 1
        %s352 = scalar_lea.sflag [#allocation3], %s351
        %s353 = sand.u32 %s235, 1
        %s354 = smul.addr %s353, 64
        %s355 = scalar_lea.vmem [#allocation2], %s354
        %p356 = scmp.lt.s32.totalorder %s23, 1
        %s357 = scalar_select %p356, %s23, 1
        %s358 = smul.addr %s357, 8
        %s359 = smul.addr %s358, 4
        %s360 = scalar_lea.vmem %s0, %s359
        %p361 = scmp.lt.s32.totalorder %s23, 1
        %s362 = scalar_select %p361, %s23, 1
        %s363 = smul.addr %s362, 8
        %s364 = smul.addr %s363, 4
        %s365 = scalar_lea.vmem %s1, %s364
        %p366 = scmp.lt.s32.totalorder %s23, 1
        %s367 = scalar_select %p366, %s23, 1
        %s368 = smul.addr %s367, 8
        %s369 = smul.addr %s368, 4
        %s370 = scalar_lea.vmem %s2, %s369
        %v372 = vld [vmem:[%s360] sm:$0xf]
        %v373 = vld [vmem:[%s360 + $0x4] sm:$0xf]
        %v374 = vld [vmem:[%s360 + $0x8] sm:$0xf]
        %v375 = vld [vmem:[%s360 + $0xc] sm:$0xf]
        %v376 = vld [vmem:[%s360 + $0x10] sm:$0xf]
        %v377 = vld [vmem:[%s360 + $0x14] sm:$0xf]
        %v378 = vld [vmem:[%s360 + $0x18] sm:$0xf]
        %v379 = vld [vmem:[%s360 + $0x1c] sm:$0xf]
        %v380 = vunpack.c.l.bf16 %v372
        %v381 = vunpack.c.l.bf16 %v373
        %v382 = vunpack.c.l.bf16 %v374
        %v383 = vunpack.c.l.bf16 %v375
        %v384 = vunpack.c.l.bf16 %v376
        %v385 = vunpack.c.l.bf16 %v377
        %v386 = vunpack.c.l.bf16 %v378
        %v387 = vunpack.c.l.bf16 %v379
        %v388 = vld [vmem:[%s365] sm:$0xf]
        %v389 = vld [vmem:[%s365 + $0x4] sm:$0xf]
        %v390 = vld [vmem:[%s365 + $0x8] sm:$0xf]
        %v391 = vld [vmem:[%s365 + $0xc] sm:$0xf]
        %v392 = vld [vmem:[%s365 + $0x10] sm:$0xf]
        %v393 = vld [vmem:[%s365 + $0x14] sm:$0xf]
        %v394 = vld [vmem:[%s365 + $0x18] sm:$0xf]
        %v395 = vld [vmem:[%s365 + $0x1c] sm:$0xf]
        %v396 = vunpack.c.l.bf16 %v388
        %v397 = vunpack.c.l.bf16 %v389
        %v398 = vunpack.c.l.bf16 %v390
        %v399 = vunpack.c.l.bf16 %v391
        %v400 = vunpack.c.l.bf16 %v392
        %v401 = vunpack.c.l.bf16 %v393
        %v402 = vunpack.c.l.bf16 %v394
        %v403 = vunpack.c.l.bf16 %v395
        %v404 = vld [vmem:[%s370] sm:$0xf]
        %v405 = vld [vmem:[%s370 + $0x4] sm:$0xf]
        %v406 = vld [vmem:[%s370 + $0x8] sm:$0xf]
        %v407 = vld [vmem:[%s370 + $0xc] sm:$0xf]
        %v408 = vld [vmem:[%s370 + $0x10] sm:$0xf]
        %v409 = vld [vmem:[%s370 + $0x14] sm:$0xf]
        %v410 = vld [vmem:[%s370 + $0x18] sm:$0xf]
        %v411 = vld [vmem:[%s370 + $0x1c] sm:$0xf]
        %v412 = vunpack.c.l.bf16 %v404
        %v413 = vunpack.c.l.bf16 %v405
        %v414 = vunpack.c.l.bf16 %v406
        %v415 = vunpack.c.l.bf16 %v407
        %v416 = vunpack.c.l.bf16 %v408
        %v417 = vunpack.c.l.bf16 %v409
        %v418 = vunpack.c.l.bf16 %v410
        %v419 = vunpack.c.l.bf16 %v411
        %v420 = vadd.f32 %v380, %v396
        %v421 = vadd.f32 %v381, %v397
        %v422 = vadd.f32 %v382, %v398
        %v423 = vadd.f32 %v383, %v399
        %v424 = vadd.f32 %v384, %v400
        %v425 = vadd.f32 %v385, %v401
        %v426 = vadd.f32 %v386, %v402
        %v427 = vadd.f32 %v387, %v403
        %v428 = vadd.f32 %v420, %v412
        %v429 = vadd.f32 %v421, %v413
        %v430 = vadd.f32 %v422, %v414
        %v431 = vadd.f32 %v423, %v415
        %v432 = vadd.f32 %v424, %v416
        %v433 = vadd.f32 %v425, %v417
        %v434 = vadd.f32 %v426, %v418
        %v435 = vadd.f32 %v427, %v419
        %vm436 = vcmask 261120
        %v437 = vsel %vm436, %v428, 0.0
        %v438 = vsel %vm436, %v429, 0.0
        %v439 = vadd.f32 %v437, %v438
        %v440 = vsel %vm436, %v430, 0.0
        %v441 = vadd.f32 %v439, %v440
        %v442 = vsel %vm436, %v431, 0.0
        %v443 = vadd.f32 %v441, %v442
        %v444 = vsel %vm436, %v432, 0.0
        %v445 = vadd.f32 %v443, %v444
        %v446 = vsel %vm436, %v433, 0.0
        %v447 = vadd.f32 %v445, %v446
        %v448 = vsel %vm436, %v434, 0.0
        %v449 = vadd.f32 %v447, %v448
        %v450 = vsel %vm436, %v435, 0.0
        %v451 = vadd.f32 %v449, %v450
        %v452 = vrot.slane %v451, 4
        %v453 = vadd.f32 %v451, %v452
        %v454 = vrot.slane %v453, 2
        %v455 = vadd.f32 %v453, %v454
        %v456 = vrot.slane %v455, 1
        %v457 = vadd.f32 %v455, %v456
        %v458 = vrcp.pop 64.0
        %v459 = vmul.f32 %v457, %v458
        %v460 = vld [vmem:[%s3] sm:$0xff]
        %v461 = vld [vmem:[%s3 + $0x8] sm:$0xff]
        %v462 = vld [vmem:[%s3 + $0x10] sm:$0xff]
        %v463 = vld [vmem:[%s3 + $0x18] sm:$0xff]
        %v464 = vld [vmem:[%s4] sm:$0x1]
        %v466 = vsel %vm436, %v459, 0
        %468 = vmatprep.subr.mxu0 0.0
        %469 = vmatpush1.msra.mxu0 0.0
        %470 = vmatprep.subr.mxu0 0.0
        %471 = vmatpush1.msra.mxu0 0.0
        %472 = vmatprep.subr.mxu0 0.0
        %473 = vmatpush1.msra.mxu0 0.0
        %474 = vmatprep.subr.mxu0 0.0
        %475 = vmatpush1.msra.mxu0 0.0
        %476 = vmatprep.subr.mxu0 0.0
        %477 = vmatpush1.msra.mxu0 0.0
        %478 = vmatprep.subr.mxu0 0.0
        %479 = vmatpush1.msra.mxu0 0.0
        %480 = vmatprep.subr.mxu0 0.0
        %481 = vmatpush1.msra.mxu0 0.0
        %482 = vmatprep.subr.mxu0 0.0
        %483 = vmatpush1.msra.mxu0 0.0
        %484 = vmatprep.subr.mxu0 0.0
        %485 = vmatpush1.msra.mxu0 0.0
        %486 = vmatprep.subr.mxu0 0.0
        %487 = vmatpush1.msra.mxu0 0.0
        %488 = vmatprep.subr.mxu0 0.0
        %489 = vmatpush1.msra.mxu0 0.0
        %490 = vmatprep.subr.mxu0 0.0
        %491 = vmatpush1.msra.mxu0 0.0
        %492 = vmatprep.subr.mxu0 0.0
        %493 = vmatpush1.msra.mxu0 %v463
        %494 = vmatprep.subr.mxu0 0.0
        %495 = vmatpush1.msra.mxu0 %v462
        %496 = vmatprep.subr.mxu0 0.0
        %497 = vmatpush1.msra.mxu0 %v461
        %498 = vmatprep.subr.mxu0 0.0
        %499 = vmatpush1.msra.mxu0 %v460
        %500 = vmatprep.subr.mxu0 0.0
        %501 = vmatpush2.msra.mxu0 0.0
        %502 = vmatprep.subr.mxu0 0.0
        %503 = vmatpush2.msra.mxu0 0.0
        %504 = vmatprep.subr.mxu0 0.0
        %505 = vmatpush2.msra.mxu0 0.0
        %506 = vmatprep.subr.mxu0 0.0
        %507 = vmatpush2.msra.mxu0 0.0
        %508 = vmatprep.subr.mxu0 0.0
        %509 = vmatpush2.msra.mxu0 0.0
        %510 = vmatprep.subr.mxu0 0.0
        %511 = vmatpush2.msra.mxu0 0.0
        %512 = vmatprep.subr.mxu0 0.0
        %513 = vmatpush2.msra.mxu0 0.0
        %514 = vmatprep.subr.mxu0 0.0
        %515 = vmatpush2.msra.mxu0 0.0
        %516 = vmatprep.subr.mxu0 0.0
        %517 = vmatpush2.msra.mxu0 0.0
        %518 = vmatprep.subr.mxu0 0.0
        %519 = vmatpush2.msra.mxu0 0.0
        %520 = vmatprep.subr.mxu0 0.0
        %521 = vmatpush2.msra.mxu0 0.0
        %522 = vmatprep.subr.mxu0 0.0
        %523 = vmatpush2.msra.mxu0 0.0
        %524 = vmatprep.subr.mxu0 0.0
        %525 = vmatpush2.msra.mxu0 0.0
        %526 = vmatprep.subr.mxu0 0.0
        %527 = vmatpush2.msra.mxu0 0.0
        %528 = vmatprep.subr.mxu0 0.0
        %529 = vmatpush2.msra.mxu0 0.0
        %530 = vmatprep.subr.mxu0 0.0
        %531 = vmatpush2.msra.mxu0 0.0
        %532 = vmatprep.mubr.f32.mxu0 0.0
        %533 = vmatmul.mubr.f32.gmra.mxu0 %v466
        %v534 = vpop.f32.mrf.mxu0
        %v535 = vadd.f32 %v464, %v534
        %v536 = vpop.f32.mrf.mxu0
        %537 = vdwg.mxu0
        %v538 = vmul.f32 %v535, 0.5
        %v539 = vmul.f32 %v535, 0.70710677
        %v540 = vand.u32 2147483647, %v539
        %v541 = vmul.f32 %v540, 0.3275911
        %v542 = vadd.f32 %v541, 1.0
        %v543 = vrcp.pop %v542
        %v544 = vmul.f32 %v543, 1.0614054
        %v545 = vadd.f32 %v544, -1.4531521
        %v546 = vmul.f32 %v545, %v543
        %v547 = vadd.f32 %v546, 1.4214138
        %v548 = vmul.f32 %v547, %v543
        %v549 = vadd.f32 %v548, -0.28449672
        %v550 = vmul.f32 %v549, %v543
        %v551 = vadd.f32 %v550, 0.2548296
        %v552 = vmul.f32 %v551, %v543
        %v553 = vsub.f32 0.0, %v540
        %v554 = vmul.f32 %v553, %v540
        %v555 = vmul.f32 %v554, 1.442695
        %v556 = vpow.pop %v555
        %v557 = vmul.f32 %v552, %v556
        %v558 = vsub.f32 1.0, %v557
        %vm559 = vcmp.lt.f32.partialorder %v539, 0.0
        %v560 = vsub.f32 0.0, %v558
        %v561 = vsel %vm559, %v560, %v558
        %v562 = vadd.f32 %v561, 1.0
        %v563 = vmul.f32 %v538, %v562
        %v564 = vld [vmem:[%s5] sm:$0xff]
        %v565 = vld [vmem:[%s6] sm:$0x1]
        %vm566 = vcmask 64512
        %v568 = vsel %vm566, %v563, 0
        %570 = vmatprep.subr.mxu0 0.0
        %571 = vmatpush1.msra.mxu0 0.0
        %572 = vmatprep.subr.mxu0 0.0
        %573 = vmatpush1.msra.mxu0 0.0
        %574 = vmatprep.subr.mxu0 0.0
        %575 = vmatpush1.msra.mxu0 0.0
        %576 = vmatprep.subr.mxu0 0.0
        %577 = vmatpush1.msra.mxu0 0.0
        %578 = vmatprep.subr.mxu0 0.0
        %579 = vmatpush1.msra.mxu0 0.0
        %580 = vmatprep.subr.mxu0 0.0
        %581 = vmatpush1.msra.mxu0 0.0
        %582 = vmatprep.subr.mxu0 0.0
        %583 = vmatpush1.msra.mxu0 0.0
        %584 = vmatprep.subr.mxu0 0.0
        %585 = vmatpush1.msra.mxu0 0.0
        %586 = vmatprep.subr.mxu0 0.0
        %587 = vmatpush1.msra.mxu0 0.0
        %588 = vmatprep.subr.mxu0 0.0
        %589 = vmatpush1.msra.mxu0 0.0
        %590 = vmatprep.subr.mxu0 0.0
        %591 = vmatpush1.msra.mxu0 0.0
        %592 = vmatprep.subr.mxu0 0.0
        %593 = vmatpush1.msra.mxu0 0.0
        %594 = vmatprep.subr.mxu0 0.0
        %595 = vmatpush1.msra.mxu0 0.0
        %596 = vmatprep.subr.mxu0 0.0
        %597 = vmatpush1.msra.mxu0 0.0
        %598 = vmatprep.subr.mxu0 0.0
        %599 = vmatpush1.msra.mxu0 0.0
        %600 = vmatprep.subr.mxu0 0.0
        %601 = vmatpush1.msra.mxu0 %v564
        %602 = vmatprep.subr.mxu0 0.0
        %603 = vmatpush2.msra.mxu0 0.0
        %604 = vmatprep.subr.mxu0 0.0
        %605 = vmatpush2.msra.mxu0 0.0
        %606 = vmatprep.subr.mxu0 0.0
        %607 = vmatpush2.msra.mxu0 0.0
        %608 = vmatprep.subr.mxu0 0.0
        %609 = vmatpush2.msra.mxu0 0.0
        %610 = vmatprep.subr.mxu0 0.0
        %611 = vmatpush2.msra.mxu0 0.0
        %612 = vmatprep.subr.mxu0 0.0
        %613 = vmatpush2.msra.mxu0 0.0
        %614 = vmatprep.subr.mxu0 0.0
        %615 = vmatpush2.msra.mxu0 0.0
        %616 = vmatprep.subr.mxu0 0.0
        %617 = vmatpush2.msra.mxu0 0.0
        %618 = vmatprep.subr.mxu0 0.0
        %619 = vmatpush2.msra.mxu0 0.0
        %620 = vmatprep.subr.mxu0 0.0
        %621 = vmatpush2.msra.mxu0 0.0
        %622 = vmatprep.subr.mxu0 0.0
        %623 = vmatpush2.msra.mxu0 0.0
        %624 = vmatprep.subr.mxu0 0.0
        %625 = vmatpush2.msra.mxu0 0.0
        %626 = vmatprep.subr.mxu0 0.0
        %627 = vmatpush2.msra.mxu0 0.0
        %628 = vmatprep.subr.mxu0 0.0
        %629 = vmatpush2.msra.mxu0 0.0
        %630 = vmatprep.subr.mxu0 0.0
        %631 = vmatpush2.msra.mxu0 0.0
        %632 = vmatprep.subr.mxu0 0.0
        %633 = vmatpush2.msra.mxu0 0.0
        %634 = vmatprep.mubr.f32.mxu0 0.0
        %635 = vmatmul.mubr.f32.gmra.mxu0 %v568
        %v636 = vpop.f32.mrf.mxu0
        %v637 = vadd.f32 %v565, %v636
        %v638 = vpop.f32.mrf.mxu0
        %639 = vdwg.mxu0
        %641 = vrot.lane.b32.xlu0 %v637, 96
        %v642 = vpop.permute.xlu0 %641
        %v644 = vmax.f32 %v637, %v642
        %645 = vrot.lane.b32.xlu0 %v637, 64
        %v646 = vpop.permute.xlu0 %645
        %v648 = vmax.f32 %v644, %v646
        %v649 = vsub.f32 %v637, %v648
        %v650 = vmul.f32 %v649, 1.442695
        %v651 = vpow.pop %v650
        %653 = vrot.lane.b32.xlu0 %v648, 32
        %v654 = vpop.permute.xlu0 %653
        %v656 = vsub.f32 %v637, %v654
        %v657 = vmul.f32 %v656, 1.442695
        %v658 = vpow.pop %v657
        %659 = vrot.lane.b32.xlu0 %v648, 64
        %v660 = vpop.permute.xlu0 %659
        %v662 = vsub.f32 %v637, %v660
        %v663 = vmul.f32 %v662, 1.442695
        %v664 = vpow.pop %v663
        %666 = vrot.lane.b32.xlu0 %v658, 96
        %v667 = vpop.permute.xlu0 %666
        %v669 = vadd.f32 %v651, %v667
        %671 = vrot.lane.b32.xlu0 %v664, 64
        %v672 = vpop.permute.xlu0 %671
        %v674 = vadd.f32 %v669, %v672
        %v675 = vrcp.pop %v674
        %v676 = vmul.f32 %v651, %v675
        %v677 = vlaneseq
        %v678 = vshrl.u32 %v677, 7
        %v679 = vsub.s32 0, %v678
        %v680 = vrot.slane %v676, %v679
        %v681 = vmul.f32 %v380, %v680
        %v682 = vmul.f32 %v381, %v680
        %v683 = vmul.f32 %v382, %v680
        %v684 = vmul.f32 %v383, %v680
        %v685 = vmul.f32 %v384, %v680
        %v686 = vmul.f32 %v385, %v680
        %v687 = vmul.f32 %v386, %v680
        %v688 = vmul.f32 %v387, %v680
        %690 = vrot.lane.b32.xlu0 %v675, 32
        %v691 = vpop.permute.xlu0 %690
        %v693 = vmul.f32 %v658, %v691
        %v694 = vlaneseq
        %v695 = vshrl.u32 %v694, 7
        %v696 = vsub.s32 0, %v695
        %v697 = vrot.slane %v693, %v696
        %699 = vrot.lane.b32.xlu0 %v697, 96
        %v700 = vpop.permute.xlu0 %699
        %v702 = vmul.f32 %v396, %v700
        %v703 = vmul.f32 %v397, %v700
        %v704 = vmul.f32 %v398, %v700
        %v705 = vmul.f32 %v399, %v700
        %v706 = vmul.f32 %v400, %v700
        %v707 = vmul.f32 %v401, %v700
        %v708 = vmul.f32 %v402, %v700
        %v709 = vmul.f32 %v403, %v700
        %v710 = vadd.f32 %v681, %v702
        %v711 = vadd.f32 %v682, %v703
        %v712 = vadd.f32 %v683, %v704
        %v713 = vadd.f32 %v684, %v705
        %v714 = vadd.f32 %v685, %v706
        %v715 = vadd.f32 %v686, %v707
        %v716 = vadd.f32 %v687, %v708
        %v717 = vadd.f32 %v688, %v709
        %718 = vrot.lane.b32.xlu0 %v675, 64
        %v719 = vpop.permute.xlu0 %718
        %v721 = vmul.f32 %v664, %v719
        %v722 = vlaneseq
        %v723 = vshrl.u32 %v722, 7
        %v724 = vsub.s32 0, %v723
        %v725 = vrot.slane %v721, %v724
        %727 = vrot.lane.b32.xlu0 %v725, 64
        %v728 = vpop.permute.xlu0 %727
        %v730 = vmul.f32 %v412, %v728
        %v731 = vmul.f32 %v413, %v728
        %v732 = vmul.f32 %v414, %v728
        %v733 = vmul.f32 %v415, %v728
        %v734 = vmul.f32 %v416, %v728
        %v735 = vmul.f32 %v417, %v728
        %v736 = vmul.f32 %v418, %v728
        %v737 = vmul.f32 %v419, %v728
        %v738 = vadd.f32 %v710, %v730
        %v739 = vadd.f32 %v711, %v731
        %v740 = vadd.f32 %v712, %v732
        %v741 = vadd.f32 %v713, %v733
        %v742 = vadd.f32 %v714, %v734
        %v743 = vadd.f32 %v715, %v735
        %v744 = vadd.f32 %v716, %v736
        %v745 = vadd.f32 %v717, %v737
        %v746 = vpack.c.bf16 %v739, %v738
        %v747 = vpack.c.bf16 %v741, %v740
        %v748 = vpack.c.bf16 %v743, %v742
        %v749 = vpack.c.bf16 %v745, %v744
        %v750 = vld [vmem:[%s7] sm:$0xf]
        %v751 = vld [vmem:[%s7 + $0x4] sm:$0xf]
        %v752 = vld [vmem:[%s7 + $0x8] sm:$0xf]
        %v753 = vld [vmem:[%s7 + $0xc] sm:$0xf]
        %v754 = vld [vmem:[%s8] sm:$0x1]
        %v756 = vlaneseq
        %v757 = vshrl.u32 %v756, 7
        %v758 = vsub.s32 0, %v757
        %v759 = vrot.slane %v754, %v758
        %v765 = vunpack.c.l.b16 %v750
        %v766 = vunpack.c.l.b16 %v751
        %v767 = vunpack.c.l.b16 %v752
        %v768 = vunpack.c.l.b16 %v753
        %v769 = vpack.c.b16 %v766, %v765
        %v770 = vpack.c.b16 %v768, %v767
        %v774 = vsel %vm436, %v746, 0
        %v777 = vsel %vm436, %v747, 0
        %v780 = vsel %vm436, %v748, 0
        %v783 = vsel %vm436, %v749, 0
        %785 = vmatprep.subr.bf16.mxu0 0
        %786 = vmatpush1.bf16.msra.mxu0 0
        %787 = vmatprep.subr.bf16.mxu0 0
        %788 = vmatpush1.bf16.msra.mxu0 0
        %789 = vmatprep.subr.bf16.mxu0 0
        %790 = vmatpush1.bf16.msra.mxu0 0
        %791 = vmatprep.subr.bf16.mxu0 0
        %792 = vmatpush1.bf16.msra.mxu0 0
        %793 = vmatprep.subr.bf16.mxu0 0
        %794 = vmatpush1.bf16.msra.mxu0 0
        %795 = vmatprep.subr.bf16.mxu0 0
        %796 = vmatpush1.bf16.msra.mxu0 0
        %797 = vmatprep.subr.bf16.mxu0 0
        %798 = vmatpush1.bf16.msra.mxu0 %v770
        %799 = vmatprep.subr.bf16.mxu0 0
        %800 = vmatpush1.bf16.msra.mxu0 %v769
        %801 = vmatprep.subr.bf16.mxu0 0
        %802 = vmatpush2.bf16.msra.mxu0 0
        %803 = vmatprep.subr.bf16.mxu0 0
        %804 = vmatpush2.bf16.msra.mxu0 0
        %805 = vmatprep.subr.bf16.mxu0 0
        %806 = vmatpush2.bf16.msra.mxu0 0
        %807 = vmatprep.subr.bf16.mxu0 0
        %808 = vmatpush2.bf16.msra.mxu0 0
        %809 = vmatprep.subr.bf16.mxu0 0
        %810 = vmatpush2.bf16.msra.mxu0 0
        %811 = vmatprep.subr.bf16.mxu0 0
        %812 = vmatpush2.bf16.msra.mxu0 0
        %813 = vmatprep.subr.bf16.mxu0 0
        %814 = vmatpush2.bf16.msra.mxu0 0
        %815 = vmatprep.subr.bf16.mxu0 0
        %816 = vmatpush2.bf16.msra.mxu0 0
        %817 = vmatprep.mubr.bf16.mxu0 0
        %818 = vmatmul.mubr.bf16.gmra.mxu0 %v774
        %v819 = vpop.f32.mrf.mxu0
        %v820 = vadd.f32 %v759, %v819
        %v821 = vpop.f32.mrf.mxu0
        %v822 = vpop.f32.mrf.mxu0
        %v823 = vadd.f32 %v759, %v822
        %v824 = vpop.f32.mrf.mxu0
        %825 = vmatprep.mubr.bf16.mxu0 0
        %826 = vmatmul.mubr.bf16.gmra.mxu0 %v777
        %v827 = vpop.f32.mrf.mxu0
        %v828 = vadd.f32 %v759, %v827
        %v829 = vpop.f32.mrf.mxu0
        %v830 = vpop.f32.mrf.mxu0
        %v831 = vadd.f32 %v759, %v830
        %v832 = vpop.f32.mrf.mxu0
        %833 = vmatprep.mubr.bf16.mxu0 0
        %834 = vmatmul.mubr.bf16.gmra.mxu0 %v780
        %v835 = vpop.f32.mrf.mxu0
        %v836 = vadd.f32 %v759, %v835
        %v837 = vpop.f32.mrf.mxu0
        %v838 = vpop.f32.mrf.mxu0
        %v839 = vadd.f32 %v759, %v838
        %v840 = vpop.f32.mrf.mxu0
        %841 = vmatprep.mubr.bf16.mxu0 0
        %842 = vmatmul.mubr.bf16.gmra.mxu0 %v783
        %v843 = vpop.f32.mrf.mxu0
        %v844 = vadd.f32 %v759, %v843
        %v845 = vpop.f32.mrf.mxu0
        %v846 = vpop.f32.mrf.mxu0
        %v847 = vadd.f32 %v759, %v846
        %v848 = vpop.f32.mrf.mxu0
        %849 = vdwg.mxu0
        %850 = vst.msk [vmem:[%s355] sm:$0xff] %vm436, %v820
        %851 = vst.msk [vmem:[%s355 + $0x8] sm:$0xff] %vm436, %v823
        %852 = vst.msk [vmem:[%s355 + $0x10] sm:$0xff] %vm436, %v828
        %853 = vst.msk [vmem:[%s355 + $0x18] sm:$0xff] %vm436, %v831
        %854 = vst.msk [vmem:[%s355 + $0x20] sm:$0xff] %vm436, %v836
        %855 = vst.msk [vmem:[%s355 + $0x28] sm:$0xff] %vm436, %v839
        %856 = vst.msk [vmem:[%s355 + $0x30] sm:$0xff] %vm436, %v844
        %857 = vst.msk [vmem:[%s355 + $0x38] sm:$0xff] %vm436, %v847
        %s858 = sand.u32 %s235, 1
        %s859 = scalar_lea.sflag [#allocation3], %s858
        %s860 = sand.u32 %s235, 1
        %s861 = smul.addr %s860, 64
        %s862 = scalar_lea.vmem [#allocation2], %s861
        // Predicated region
        $region57: #{weighted_permute_mlp.3} parent=55 // pred_check
          %p863 = pneg %p245
        $region58: #{weighted_permute_mlp.3} parent=55 // pred_check_branch
          %865 = sbr.rel (%p863) target = $region60
        $region59: #{weighted_permute_mlp.3} parent=55 // pred_region
          %s867 = ssub.s32 1024, 1024
          %868 = vsyncadd %s859, %s867
          %s869 = smul.addr %s23, 8
          %s870 = smul.addr %s869, 128
          %s871 = scalar_lea.hbm %s9, %s870
          %s872 = sshll.u32 %s862, 4
          %s873 = int_to_ptr.vmem [resolvable:$true] %s872
          %878 = dma.vmem_to_hbm [thread:$0]  %s873, 1024, %s871, %s859, 128, 128, 8
        $region60: #{weighted_permute_mlp.3} parent=55 // pred_fallthru
          _
      $region56: #{weighted_permute_mlp.3} parent=5 // pred_fallthru
        _
      %p879 = scmp.le.s32.totalorder 2, %s18
      // Predicated region
      $region61: #{weighted_permute_mlp.3} parent=5 // pred_check
        %p880 = pneg %p879
      $region62: #{weighted_permute_mlp.3} parent=5 // pred_check_branch
        %882 = sbr.rel (%p880) target = $region64
      $region63: #{weighted_permute_mlp.3} parent=5 // pred_region
        %s883 = ssub.s32 %s18, 2
        // Predicated region
        $region65: #{weighted_permute_mlp.3} parent=63 // pred_check
          %p884 = pneg %p251
        $region66: #{weighted_permute_mlp.3} parent=63 // pred_check_branch
          %886 = sbr.rel (%p884) target = $region68
        $region67: #{weighted_permute_mlp.3} parent=63 // pred_region
          %s887 = sand.u32 %s236, 1
          %s888 = scalar_lea.sflag [#allocation3], %s887
          %s889 = sand.u32 %s236, 1
          %s890 = smul.addr %s889, 64
          %s891 = scalar_lea.vmem [#allocation2], %s890
          %892 = dma.done %s888, 1024
        $region68: #{weighted_permute_mlp.3} parent=63 // pred_fallthru
          _
      $region64: #{weighted_permute_mlp.3} parent=5 // pred_fallthru
        _
    $region6: #{weighted_permute_mlp.3} parent=1 // loop_footer
      %s22 = sadd.s32 1, %s18
    $region7: #{weighted_permute_mlp.3} parent=1 // loop_footer_branch
      %17 = sbr.rel target = $region3
    $region8: #{weighted_permute_mlp.3} parent=1 // loop_exit
      _
    %893 = vsyncpa [#allocation3], 1
    %s894 = scalar_lea.sflag [#allocation3], 1
    %895 = vsyncpa %s894, 1

</llo_original>
